<compile_context>
chip_gen: v6e
topology: v6e:2x2x1
jax: 0.10.0
libtpu: 0.0.40
codegen_flags: <defaults>
</compile_context>

<pallas_src>
import functools

import numpy as np
import jax
import jax.numpy as jnp
from jax.experimental import pallas as pl
from jax.experimental.pallas import tpu as pltpu


# ----------------------------------------------------------------------------- #
# Host-side constant builders (match torch / torchaudio defaults).
# ----------------------------------------------------------------------------- #
def _hamming_window(win_length: int) -> np.ndarray:
    # torch.hamming_window(win_length) default: periodic=True, alpha=0.54, beta=0.46
    n = np.arange(win_length, dtype=np.float64)
    return 0.54 - 0.46 * np.cos(2.0 * np.pi * n / win_length)


def _make_mel_fb(sample_rate: int, n_fft: int, n_mels: int,
                 f_min: float = 0.0, f_max: float | None = None) -> np.ndarray:
    """torchaudio.functional.melscale_fbanks (HTK, norm=None), shape (n_freqs, n_mels)."""
    if f_max is None:
        f_max = sample_rate / 2.0
    n_freqs = n_fft // 2 + 1
    all_freqs = np.linspace(0.0, sample_rate // 2, n_freqs)

    def hz_to_mel(hz):
        return 2595.0 * np.log10(1.0 + np.asarray(hz, dtype=np.float64) / 700.0)

    def mel_to_hz(mel):
        return 700.0 * (10.0 ** (np.asarray(mel, dtype=np.float64) / 2595.0) - 1.0)

    m_pts = np.linspace(hz_to_mel(f_min), hz_to_mel(f_max), n_mels + 2)
    f_pts = mel_to_hz(m_pts)
    f_diff = f_pts[1:] - f_pts[:-1]                              # (n_mels + 1,)
    slopes = f_pts[None, :] - all_freqs[:, None]                 # (n_freqs, n_mels + 2)
    down = (-1.0 * slopes[:, :-2]) / f_diff[:-1]
    up = slopes[:, 2:] / f_diff[1:]
    fb = np.maximum(0.0, np.minimum(down, up))                   # (n_freqs, n_mels)
    return fb.astype(np.float64)


def _make_constants(sample_rate: int, n_fft: int, n_mels: int, win_length: int):
    """Build fused windowed-DFT basis and trimmed mel filterbank.

    Returns:
      basis: (n_fft, 2*f_used) f32, columns [0, f_used)   = window * cos,
                                    columns [f_used, 2*f) = window * -sin.
      fb:    (f_used, n_mels)  f32 mel filterbank restricted to the active bins.
      f_used: number of frequency bins kept (multiple of 128, exact trim).
    """
    n_freqs = n_fft // 2 + 1
    fb_full = _make_mel_fb(sample_rate, n_fft, n_mels)           # (n_freqs, n_mels)

    # Exact trim: drop trailing all-zero filterbank rows (e.g. the Nyquist bin),
    # then round up to a lane-dense multiple of 128.
    nz_rows = np.nonzero(np.any(fb_full != 0.0, axis=1))[0]
    n_active = int(nz_rows[-1]) + 1 if nz_rows.size else 1
    f_used = ((n_active + 127) // 128) * 128
    f_used = min(f_used, ((n_freqs + 127) // 128) * 128)
    f_used = max(f_used, 128)

    # Windowed DFT bases.  torch.stft centers the win_length window inside n_fft.
    w = _hamming_window(win_length)
    left = (n_fft - win_length) // 2
    w_full = np.zeros(n_fft, dtype=np.float64)
    w_full[left:left + win_length] = w

    k = np.arange(n_fft, dtype=np.float64)[:, None]              # time index
    f = np.arange(f_used, dtype=np.float64)[None, :]             # freq index (trimmed)
    # Guard: if f_used > n_freqs (padding case), pad columns are exact zeros.
    valid = (f < n_freqs).astype(np.float64)
    ang = 2.0 * np.pi * k * f / n_fft
    cw = (w_full[:, None] * np.cos(ang)) * valid
    sw = (-w_full[:, None] * np.sin(ang)) * valid
    basis = np.concatenate([cw, sw], axis=1).astype(np.float32)  # (n_fft, 2*f_used)

    fb = np.zeros((f_used, n_mels), dtype=np.float64)
    rows = min(f_used, n_freqs)
    fb[:rows, :] = fb_full[:rows, :]
    return basis, fb.astype(np.float32), f_used


def _frame_signal(wav: jax.Array, n_fft: int, hop_length: int) -> jax.Array:
    """center=True framing: reflect-pad n_fft//2 each side, overlapping frames."""
    b, t = wav.shape
    pad = n_fft // 2
    xp = jnp.pad(wav, ((0, 0), (pad, pad)), mode="reflect")
    n_frames = 1 + t // hop_length
    starts = jnp.arange(n_frames) * hop_length
    idx = starts[:, None] + jnp.arange(n_fft)[None, :]           # (n_frames, n_fft)
    return xp[:, idx]                                            # (B, n_frames, n_fft)


# ----------------------------------------------------------------------------- #
# Pallas kernel: fused windowed DFT -> power -> mel -> log -> instance norm.
# ----------------------------------------------------------------------------- #
def _mel_kernel(frames_ref, basis_ref, fb_ref, out_ref, *,
                f_used: int, apply_log: bool, do_norm: bool,
                epsilon: float, norm_eps: float):
    frames = frames_ref[0]                                       # (n_frames, n_fft)

    # Single MXU matmul produces both Re(X) and Im(X) of the windowed rfft.
    dft = jnp.dot(frames, basis_ref[...], preferred_element_type=jnp.float32)
    re = dft[:, :f_used]                                         # lane-aligned slice
    im = dft[:, f_used:]
    power = re * re + im * im                                    # (n_frames, f_used)

    # Mel projection (trimmed rows are exact -- dropped bins have zero filters).
    feat = jnp.dot(power, fb_ref[...], preferred_element_type=jnp.float32)

    if apply_log:
        feat = jnp.log(feat + epsilon)

    if do_norm:
        # InstanceNorm2d(1): per-sample mean / biased variance over (n_frames, n_mels).
        n = feat.shape[0] * feat.shape[1]
        total = jnp.sum(jnp.sum(feat, axis=-1, keepdims=True), axis=-2, keepdims=True)
        mean = total / n
        centered = feat - mean
        sq = jnp.sum(jnp.sum(centered * centered, axis=-1, keepdims=True),
                     axis=-2, keepdims=True)
        var = sq / n
        feat = centered * jax.lax.rsqrt(var + norm_eps)

    out_ref[0] = feat.astype(out_ref.dtype)


def mel_filterbank(x: jax.Array, *, sampling_rate: int = 16000, n_fft: int = 512,
                   n_mels: int = 40, win_length: int = 400, hop_length: int = 160,
                   apply_log: bool = True, norm: str = "instancenorm2d",
                   epsilon: float = 1e-10, norm_eps: float = 1e-5) -> jax.Array:
    """Pallas implementation of MelFilterbank.forward.

    x: (B, T, C) with C == 1.  Returns (B, n_frames, n_mels) float32,
    n_frames = 1 + T // hop_length.
    """
    b, t, c = x.shape
    assert c == 1, "MelFilterbank rearrange requires C == 1"

    wav = x[..., 0].astype(jnp.float32)                          # (B, T)
    frames = _frame_signal(wav, n_fft, hop_length)               # (B, n_frames, n_fft)
    n_frames = frames.shape[1]

    basis_np, fb_np, f_used = _make_constants(sampling_rate, n_fft, n_mels, win_length)
    basis = jnp.asarray(basis_np)                                # (n_fft, 2*f_used)
    fb = jnp.asarray(fb_np)                                      # (f_used, n_mels)

    kernel = functools.partial(
        _mel_kernel,
        f_used=f_used,
        apply_log=apply_log,
        do_norm=(norm == "instancenorm2d"),
        epsilon=epsilon,
        norm_eps=norm_eps,
    )

    out_shape = jax.ShapeDtypeStruct((b, n_frames, n_mels), jnp.float32)

    flops_per_item = 2 * n_frames * n_fft * (2 * f_used) + 2 * n_frames * f_used * n_mels
    cost = pl.CostEstimate(
        flops=b * flops_per_item,
        transcendentals=b * n_frames * n_mels,
        bytes_accessed=(frames.size + basis.size + fb.size + b * n_frames * n_mels) * 4,
    )

    return pl.pallas_call(
        kernel,
        out_shape=out_shape,
        grid_spec=pltpu.PrefetchScalarGridSpec(
            num_scalar_prefetch=0,
            grid=(b,),
            in_specs=[
                # lane-dense frames slab for one batch element
                pl.BlockSpec((1, n_frames, n_fft), lambda i: (i, 0, 0)),
                # fused DFT basis and mel fb are grid-invariant full blocks
                pl.BlockSpec((n_fft, 2 * f_used), lambda i: (0, 0)),
                pl.BlockSpec((f_used, n_mels), lambda i: (0, 0)),
            ],
            out_specs=pl.BlockSpec((1, n_frames, n_mels), lambda i: (i, 0, 0)),
        ),
        compiler_params=pltpu.CompilerParams(
            dimension_semantics=("parallel",),
        ),
        cost_estimate=cost,
    )(frames, basis, fb)


# ----------------------------------------------------------------------------- #
# Pure-JAX reference (same math, XLA-executed) for correctness checking.
# ----------------------------------------------------------------------------- #
def mel_filterbank_reference(x: jax.Array, *, sampling_rate: int = 16000,
                             n_fft: int = 512, n_mels: int = 40,
                             win_length: int = 400, hop_length: int = 160,
                             apply_log: bool = True, norm: str = "instancenorm2d",
                             epsilon: float = 1e-10, norm_eps: float = 1e-5):
    wav = x[..., 0].astype(jnp.float32)
    frames = _frame_signal(wav, n_fft, hop_length)
    basis_np, fb_np, f_used = _make_constants(sampling_rate, n_fft, n_mels, win_length)
    basis, fb = jnp.asarray(basis_np), jnp.asarray(fb_np)

    dft = jnp.einsum("bnk,kf->bnf", frames, basis)
    re, im = dft[..., :f_used], dft[..., f_used:]
    power = re * re + im * im
    feat = jnp.einsum("bnf,fm->bnm", power, fb)
    if apply_log:
        feat = jnp.log(feat + epsilon)
    if norm == "instancenorm2d":
        mean = jnp.mean(feat, axis=(1, 2), keepdims=True)
        var = jnp.mean((feat - mean) ** 2, axis=(1, 2), keepdims=True)
        feat = (feat - mean) * jax.lax.rsqrt(var + norm_eps)
    return feat


if __name__ == "__main__":
    B, T, C = 2, 1600, 1                     # 0.1 s of 16 kHz audio -> 11 frames
    hop, n_mels = 160, 40

    key = jax.random.PRNGKey(0)
    x = jax.random.normal(key, (B, T, C), dtype=jnp.float32)

    out = jax.block_until_ready(mel_filterbank(x))
    ref = jax.block_until_ready(mel_filterbank_reference(x))

    n_frames = 1 + T // hop
    assert out.shape == (B, n_frames, n_mels), out.shape
    assert out.dtype == jnp.float32
    max_err = float(jnp.max(jnp.abs(out - ref)))
    assert bool(jnp.allclose(out, ref, atol=5e-2, rtol=5e-2)), f"max_err={max_err}"

    print("KERNEL_OK")
</pallas_src>

<mosaic_0001>
module attributes {stable_mosaic.version = 11 : i64} {
  func.func @_mel_kernel(%arg0: i32, %arg1: memref<1x11x512xf32, #tpu.memory_space<vmem>>, %arg2: memref<512x768xf32, #tpu.memory_space<vmem>>, %arg3: memref<384x40xf32, #tpu.memory_space<vmem>>, %arg4: memref<1x11x40xf32, #tpu.memory_space<vmem>>) attributes {dimension_semantics = [#tpu.dimension_semantics<parallel>], iteration_bounds = array<i64: 2>, scalar_prefetch = 0 : i64, scratch_operands = 0 : i64, tpu.core_type = #tpu.core_type<tc>, window_params = [{transform_indices = @transform_0, window_bounds = array<i64: 1, 11, 512>}, {pipeline_mode = #tpu.pipeline_mode<synchronous>, transform_indices = @transform_1, window_bounds = array<i64: 512, 768>}, {pipeline_mode = #tpu.pipeline_mode<synchronous>, transform_indices = @transform_2, window_bounds = array<i64: 384, 40>}, {transform_indices = @transform_3, window_bounds = array<i64: 1, 11, 40>}]} {
    %c0 = arith.constant 0 : index
    %c0_0 = arith.constant 0 : index
    %c0_1 = arith.constant 0 : index
    %0 = vector.load %arg1[%c0, %c0_0, %c0_1] : memref<1x11x512xf32, #tpu.memory_space<vmem>>, vector<1x11x512xf32>
    %1 = vector.shape_cast %0 : vector<1x11x512xf32> to vector<11x512xf32>
    %c0_2 = arith.constant 0 : index
    %c0_3 = arith.constant 0 : index
    %2 = vector.load %arg2[%c0_2, %c0_3] : memref<512x768xf32, #tpu.memory_space<vmem>>, vector<512x768xf32>
    %cst = arith.constant dense<0.000000e+00> : vector<11x768xf32>
    %3 = tpu.matmul %1, %2, %cst {dimension_numbers = #tpu.dot_dimension_numbers<[1], [0], [0], [1], [0, 0, 1, 1], [], []>} : vector<11x512xf32>, vector<512x768xf32>, vector<11x768xf32> -> vector<11x768xf32>
    %4 = vector.extract_strided_slice %3 {offsets = [0, 0], sizes = [11, 384], strides = [1, 1]} : vector<11x768xf32> to vector<11x384xf32>
    %5 = vector.extract_strided_slice %3 {offsets = [0, 384], sizes = [11, 384], strides = [1, 1]} : vector<11x768xf32> to vector<11x384xf32>
    %6 = arith.mulf %4, %4 : vector<11x384xf32>
    %7 = arith.mulf %5, %5 : vector<11x384xf32>
    %8 = arith.addf %6, %7 : vector<11x384xf32>
    %c0_4 = arith.constant 0 : index
    %c0_5 = arith.constant 0 : index
    %9 = vector.load %arg3[%c0_4, %c0_5] : memref<384x40xf32, #tpu.memory_space<vmem>>, vector<384x40xf32>
    %cst_6 = arith.constant dense<0.000000e+00> : vector<11x40xf32>
    %10 = tpu.matmul %8, %9, %cst_6 {dimension_numbers = #tpu.dot_dimension_numbers<[1], [0], [0], [1], [0, 0, 1, 1], [], []>} : vector<11x384xf32>, vector<384x40xf32>, vector<11x40xf32> -> vector<11x40xf32>
    %cst_7 = arith.constant 1.000000e-10 : f32
    %11 = vector.broadcast %cst_7 : f32 to vector<11x40xf32>
    %12 = arith.addf %10, %11 : vector<11x40xf32>
    %13 = math.log %12 : vector<11x40xf32>
    %cst_8 = arith.constant dense<0.000000e+00> : vector<11xf32>
    %14 = vector.multi_reduction <add>, %13, %cst_8 [1] : vector<11x40xf32> to vector<11xf32>
    %15 = vector.shape_cast %14 : vector<11xf32> to vector<11x1xf32>
    %cst_9 = arith.constant dense<0.000000e+00> : vector<1xf32>
    %16 = vector.multi_reduction <add>, %15, %cst_9 [0] : vector<11x1xf32> to vector<1xf32>
    %17 = vector.shape_cast %16 : vector<1xf32> to vector<1x1xf32>
    %cst_10 = arith.constant 4.400000e+02 : f32
    %18 = vector.broadcast %cst_10 : f32 to vector<1x1xf32>
    %19 = arith.divf %17, %18 : vector<1x1xf32>
    %20 = vector.broadcast %19 : vector<1x1xf32> to vector<11x40xf32>
    %21 = arith.subf %13, %20 : vector<11x40xf32>
    %22 = arith.mulf %21, %21 : vector<11x40xf32>
    %cst_11 = arith.constant dense<0.000000e+00> : vector<11xf32>
    %23 = vector.multi_reduction <add>, %22, %cst_11 [1] : vector<11x40xf32> to vector<11xf32>
    %24 = vector.shape_cast %23 : vector<11xf32> to vector<11x1xf32>
    %cst_12 = arith.constant dense<0.000000e+00> : vector<1xf32>
    %25 = vector.multi_reduction <add>, %24, %cst_12 [0] : vector<11x1xf32> to vector<1xf32>
    %26 = vector.shape_cast %25 : vector<1xf32> to vector<1x1xf32>
    %cst_13 = arith.constant 4.400000e+02 : f32
    %27 = vector.broadcast %cst_13 : f32 to vector<1x1xf32>
    %28 = arith.divf %26, %27 : vector<1x1xf32>
    %cst_14 = arith.constant 9.99999974E-6 : f32
    %29 = vector.broadcast %cst_14 : f32 to vector<1x1xf32>
    %30 = arith.addf %28, %29 : vector<1x1xf32>
    %31 = math.rsqrt %30 : vector<1x1xf32>
    %32 = vector.broadcast %31 : vector<1x1xf32> to vector<11x40xf32>
    %33 = arith.mulf %21, %32 : vector<11x40xf32>
    %c0_15 = arith.constant 0 : index
    %c0_16 = arith.constant 0 : index
    %c0_17 = arith.constant 0 : index
    %34 = vector.load %arg4[%c0_15, %c0_16, %c0_17] : memref<1x11x40xf32, #tpu.memory_space<vmem>>, vector<1x11x40xf32>
    %35 = vector.shape_cast %34 : vector<1x11x40xf32> to vector<11x40xf32>
    %36 = vector.shape_cast %33 : vector<11x40xf32> to vector<1x11x40xf32>
    tpu.vector_store %arg4[%c0_15, %c0_16, %c0_17], %36 {strides = array<i32>} : memref<1x11x40xf32, #tpu.memory_space<vmem>>, vector<1x11x40xf32>,
    return
  }
  func.func @transform_0(%arg0: i32) -> (i32, i32, i32) {
    %c0_i32 = arith.constant 0 : i32
    %c0_i32_0 = arith.constant 0 : i32
    %c0_i32_1 = arith.constant 0 : i32
    return %arg0, %c0_i32, %c0_i32_0 : i32, i32, i32
  }
  func.func @transform_1(%arg0: i32) -> (i32, i32) {
    %c0_i32 = arith.constant 0 : i32
    %c0_i32_0 = arith.constant 0 : i32
    %c0_i32_1 = arith.constant 0 : i32
    return %c0_i32, %c0_i32_0 : i32, i32
  }
  func.func @transform_2(%arg0: i32) -> (i32, i32) {
    %c0_i32 = arith.constant 0 : i32
    %c0_i32_0 = arith.constant 0 : i32
    %c0_i32_1 = arith.constant 0 : i32
    return %c0_i32, %c0_i32_0 : i32, i32
  }
  func.func @transform_3(%arg0: i32) -> (i32, i32, i32) {
    %c0_i32 = arith.constant 0 : i32
    %c0_i32_0 = arith.constant 0 : i32
    %c0_i32_1 = arith.constant 0 : i32
    return %arg0, %c0_i32, %c0_i32_0 : i32, i32, i32
  }
}

</mosaic_0001>

<llo_original>
// kernel: tpu_custom_call.1
$region0: #{tpu_custom_call.1}
  #allocation0 [shape = 'u32[]', space=smem, size = 0x4, offset = 0x4, fixed_abs, tag = 'smem constant byte address 0x4 - core index']
  #allocation1 [shape = 'u32[144,128]{1,0:T(1,128)}', space=vmem, size = 0x12000, scoped, tag = 'internal scratch']
  %s0 = inlined_call_operand.vmem [shape: f32[2,11,512], index: 0, kind: input, shape index: {}]
  %s1 = inlined_call_operand.hbm [shape: f32[512,768], index: 1, kind: input, shape index: {}]
  %s2 = inlined_call_operand.vmem [shape: f32[384,40], index: 2, kind: input, shape index: {}]
  %s3 = inlined_call_operand.vmem [shape: f32[2,11,40], index: 3, kind: output, shape index: {}]
  %s4 = sld [smem:[#allocation0]]
  $region49: #{tpu_custom_call.1} parent=0
    _
  %s6 = ssub.s32 1, %s4
  %s7 = scalar_select 0, %s6, %s4
  $region1: #{tpu_custom_call.1} parent=0
    #allocation2 [shape = 'u8[1572864]{0}', space=vmem, size = 0x180000, scoped, tag = 'input window, operand 1, single buffered']
    #allocation3 [shape = 's32[2]{0}', space=sflag, size = 0x8, scoped, tag = 'scoped memory for tpu_custom_call.1']
    %8 = vsyncpa [#allocation3], 0
    loop: start=0, step=1, limit=4
    $region2: #{tpu_custom_call.1} parent=1 // loop_pre_header
      _
    $region3: #{tpu_custom_call.1} parent=1 // loop_header
      %s10 = sphi 0, %s14
      %p11 = scmp.ge.s32.totalorder %s10, 4
      %s20 = sphi 0, %s22
      %s23 = sphi 0, %s20
      %s24 = sphi 0, %s23
      %s40 = sphi 0, %s24
      %s44 = sphi 0, %s44
      %s46 = sphi 0, %s44
      %s47 = sphi 0, %s46
      %s61 = sphi 0, %s47
      %s65 = sphi 0, %s65
      %s67 = sphi 0, %s65
      %s68 = sphi 0, %s67
      %s82 = sphi 0, %s68
      %s88 = sphi 0, %s90
      %s91 = sphi 0, %s88
      %s92 = sphi 0, %s91
      %s108 = sphi 0, %s92
    $region4: #{tpu_custom_call.1} parent=1 // loop_header_branch
      %13 = sbr.rel (%p11) target = $region8
    $region5: #{tpu_custom_call.1} parent=1 // loop_body
      %s15 = ssub.s32 %s10, 1
      %s16 = ssub.s32 %s10, 2
      %s17 = sadd.s32 %s10, 1
      %s18 = ssub.s32 %s10, %s17
      %p19 = scmp.eq.s32.totalorder %s18, 0
      %s21 = sadd.s32 %s20, 1
      %s22 = scalar_select %p19, %s20, %s21
      %p25 = pneg %p19
      %p26 = scmp.eq.s32.totalorder %s10, 1
      %p27 = por %p25, %p26
      %p28 = scmp.ne.s32.totalorder %s20, %s23
      %p29 = scmp.eq.s32.totalorder %s10, 0
      %p30 = por %p28, %p29
      %p31 = scmp.ne.s32.totalorder %s20, %s23
      %p32 = scmp.eq.s32.totalorder %s15, 1
      %p33 = por %p31, %p32
      %p34 = scmp.ne.s32.totalorder %s23, %s24
      %p35 = scmp.eq.s32.totalorder %s15, 0
      %p36 = por %p34, %p35
      %p37 = scmp.ne.s32.totalorder %s23, %s24
      %p38 = scmp.eq.s32.totalorder %s16, 1
      %p39 = por %p37, %p38
      %p41 = scmp.ne.s32.totalorder %s24, %s40
      %p42 = scmp.eq.s32.totalorder %s16, 0
      %p43 = por %p41, %p42
      %s45 = sadd.s32 %s44, 1
      %p48 = scmp.eq.s32.totalorder %s10, 1
      %p49 = scmp.ne.s32.totalorder %s44, %s46
      %p50 = scmp.eq.s32.totalorder %s10, 0
      %p51 = por %p49, %p50
      %p52 = scmp.ne.s32.totalorder %s44, %s46
      %p53 = scmp.eq.s32.totalorder %s15, 1
      %p54 = por %p52, %p53
      %p55 = scmp.ne.s32.totalorder %s46, %s47
      %p56 = scmp.eq.s32.totalorder %s15, 0
      %p57 = por %p55, %p56
      %p58 = scmp.ne.s32.totalorder %s46, %s47
      %p59 = scmp.eq.s32.totalorder %s16, 1
      %p60 = por %p58, %p59
      %p62 = scmp.ne.s32.totalorder %s47, %s61
      %p63 = scmp.eq.s32.totalorder %s16, 0
      %p64 = por %p62, %p63
      %s66 = sadd.s32 %s65, 1
      %p69 = scmp.eq.s32.totalorder %s10, 1
      %p70 = scmp.ne.s32.totalorder %s65, %s67
      %p71 = scmp.eq.s32.totalorder %s10, 0
      %p72 = por %p70, %p71
      %p73 = scmp.ne.s32.totalorder %s65, %s67
      %p74 = scmp.eq.s32.totalorder %s15, 1
      %p75 = por %p73, %p74
      %p76 = scmp.ne.s32.totalorder %s67, %s68
      %p77 = scmp.eq.s32.totalorder %s15, 0
      %p78 = por %p76, %p77
      %p79 = scmp.ne.s32.totalorder %s67, %s68
      %p80 = scmp.eq.s32.totalorder %s16, 1
      %p81 = por %p79, %p80
      %p83 = scmp.ne.s32.totalorder %s68, %s82
      %p84 = scmp.eq.s32.totalorder %s16, 0
      %p85 = por %p83, %p84
      %s86 = ssub.s32 %s10, %s17
      %p87 = scmp.eq.s32.totalorder %s86, 0
      %s89 = sadd.s32 %s88, 1
      %s90 = scalar_select %p87, %s88, %s89
      %p93 = pneg %p87
      %p94 = scmp.eq.s32.totalorder %s10, 1
      %p95 = por %p93, %p94
      %p96 = scmp.ne.s32.totalorder %s88, %s91
      %p97 = scmp.eq.s32.totalorder %s10, 0
      %p98 = por %p96, %p97
      %p99 = scmp.ne.s32.totalorder %s88, %s91
      %p100 = scmp.eq.s32.totalorder %s15, 1
      %p101 = por %p99, %p100
      %p102 = scmp.ne.s32.totalorder %s91, %s92
      %p103 = scmp.eq.s32.totalorder %s15, 0
      %p104 = por %p102, %p103
      %p105 = scmp.ne.s32.totalorder %s91, %s92
      %p106 = scmp.eq.s32.totalorder %s16, 1
      %p107 = por %p105, %p106
      %p109 = scmp.ne.s32.totalorder %s92, %s108
      %p110 = scmp.eq.s32.totalorder %s16, 0
      %p111 = por %p109, %p110
      %p112 = scmp.le.s32.totalorder 1, %s10
      %p113 = scmp.lt.s32.totalorder %s10, 3
      %p114 = pnand %p112, %p113
      %p115 = pneg %p114
      // Predicated region
      $region9: #{tpu_custom_call.1} parent=5 // pred_check
        _
      $region10: #{tpu_custom_call.1} parent=5 // pred_check_branch
        %117 = sbr.rel (%p114) target = $region12
      $region11: #{tpu_custom_call.1} parent=5 // pred_region
        %s118 = ssub.s32 %s10, 1
        // Predicated region
        $region13: #{tpu_custom_call.1} parent=11 // pred_check
          %p119 = pneg %p57
        $region14: #{tpu_custom_call.1} parent=11 // pred_check_branch
          %121 = sbr.rel (%p119) target = $region16
        $region15: #{tpu_custom_call.1} parent=11 // pred_region
          %s123 = ssub.s32 49152, 49152
          %124 = vsyncadd [#allocation3], %s123
          %s125 = sshll.u32 [#allocation2], 4
          %s126 = int_to_ptr.vmem [resolvable:$true] %s125
          %131 = dma.hbm_to_vmem [thread:$0]  %s1, 49152, %s126, [#allocation3], 768, 768, 48
        $region16: #{tpu_custom_call.1} parent=11 // pred_fallthru
          _
        // Predicated region
        $region17: #{tpu_custom_call.1} parent=11 // pred_check
          %p132 = pneg %p78
        $region18: #{tpu_custom_call.1} parent=11 // pred_check_branch
          %134 = sbr.rel (%p132) target = $region20
        $region19: #{tpu_custom_call.1} parent=11 // pred_region
          _
        $region20: #{tpu_custom_call.1} parent=11 // pred_fallthru
          _
      $region12: #{tpu_custom_call.1} parent=5 // pred_fallthru
        _
      %p135 = scmp.lt.s32.totalorder %s10, 2
      // Predicated region
      $region21: #{tpu_custom_call.1} parent=5 // pred_check
        %p136 = pneg %p135
      $region22: #{tpu_custom_call.1} parent=5 // pred_check_branch
        %138 = sbr.rel (%p136) target = $region24
      $region23: #{tpu_custom_call.1} parent=5 // pred_region
        // Predicated region
        $region25: #{tpu_custom_call.1} parent=23 // pred_check
          %p139 = pneg %p30
        $region26: #{tpu_custom_call.1} parent=23 // pred_check_branch
          %141 = sbr.rel (%p139) target = $region28
        $region27: #{tpu_custom_call.1} parent=23 // pred_region
          %p142 = scmp.lt.s32.totalorder %s10, 1
          %s143 = scalar_select %p142, %s10, 1
          %s144 = smul.addr %s143, 8
          %s145 = smul.addr %s144, 8
          %s146 = scalar_lea.vmem %s0, %s145
        $region28: #{tpu_custom_call.1} parent=23 // pred_fallthru
          _
      $region24: #{tpu_custom_call.1} parent=5 // pred_fallthru
        _
      %p147 = scmp.le.s32.totalorder 1, %s10
      %p148 = scmp.lt.s32.totalorder %s10, 3
      %p149 = pnand %p147, %p148
      %p150 = pneg %p149
      // Predicated region
      $region29: #{tpu_custom_call.1} parent=5 // pred_check
        _
      $region30: #{tpu_custom_call.1} parent=5 // pred_check_branch
        %152 = sbr.rel (%p149) target = $region32
      $region31: #{tpu_custom_call.1} parent=5 // pred_region
        %s153 = ssub.s32 %s10, 1
        // Predicated region
        $region33: #{tpu_custom_call.1} parent=31 // pred_check
          %p154 = pneg %p57
        $region34: #{tpu_custom_call.1} parent=31 // pred_check_branch
          %156 = sbr.rel (%p154) target = $region36
        $region35: #{tpu_custom_call.1} parent=31 // pred_region
          %157 = dma.done [#allocation3], 49152
        $region36: #{tpu_custom_call.1} parent=31 // pred_fallthru
          _
        %p158 = scmp.lt.s32.totalorder %s15, 1
        %s159 = scalar_select %p158, %s15, 1
        %s160 = smul.addr %s159, 8
        %s161 = smul.addr %s160, 8
        %s162 = scalar_lea.vmem %s0, %s161
        %p163 = pneg %p36
        %p164 = pneg %p33
        %p165 = pneg %p57
        %p166 = pneg %p54
        %p167 = pneg %p78
        %p168 = pneg %p75
        %p169 = pneg %p104
        %p170 = pneg %p101
        %p171 = scmp.lt.s32.totalorder %s15, 1
        %s172 = scalar_select %p171, %s15, 1
        %s173 = smul.addr %s172, 2
        %s174 = smul.addr %s173, 8
        %s175 = scalar_lea.vmem %s3, %s174
        %p176 = scmp.lt.s32.totalorder %s15, 1
        %s177 = scalar_select %p176, %s15, 1
        %s178 = smul.addr %s177, 8
        %s179 = smul.addr %s178, 8
        %s180 = scalar_lea.vmem %s0, %s179
        %p181 = scmp.lt.s32.totalorder %s15, 1
        %s182 = scalar_select %p181, %s15, 1
        %s183 = smul.addr %s182, 2
        %s184 = smul.addr %s183, 8
        %s185 = scalar_lea.vmem %s3, %s184
        %v186 = vld [vmem:[%s180] sm:$0xff]
        %v187 = vld [vmem:[%s180 + $0x8] sm:$0xff]
        %v188 = vld [vmem:[%s180 + $0x10] sm:$0xff]
        %v189 = vld [vmem:[%s180 + $0x18] sm:$0xff]
        %v190 = vld [vmem:[%s180 + $0x20] sm:$0x7]
        %v191 = vld [vmem:[%s180 + $0x28] sm:$0x7]
        %v192 = vld [vmem:[%s180 + $0x30] sm:$0x7]
        %v193 = vld [vmem:[%s180 + $0x38] sm:$0x7]
        %v194 = vld [vmem:[#allocation2] sm:$0xff]
        %v195 = vld [vmem:[#allocation2 + $0x8] sm:$0xff]
        %v196 = vld [vmem:[#allocation2 + $0x10] sm:$0xff]
        %v197 = vld [vmem:[#allocation2 + $0x18] sm:$0xff]
        %v198 = vld [vmem:[#allocation2 + $0x20] sm:$0xff]
        %v199 = vld [vmem:[#allocation2 + $0x28] sm:$0xff]
        %v200 = vld [vmem:[#allocation2 + $0x30] sm:$0xff]
        %v201 = vld [vmem:[#allocation2 + $0x38] sm:$0xff]
        %v202 = vld [vmem:[#allocation2 + $0x40] sm:$0xff]
        %v203 = vld [vmem:[#allocation2 + $0x48] sm:$0xff]
        %v204 = vld [vmem:[#allocation2 + $0x50] sm:$0xff]
        %v205 = vld [vmem:[#allocation2 + $0x58] sm:$0xff]
        %v206 = vld [vmem:[#allocation2 + $0x60] sm:$0xff]
        %v207 = vld [vmem:[#allocation2 + $0x68] sm:$0xff]
        %v208 = vld [vmem:[#allocation2 + $0x70] sm:$0xff]
        %v209 = vld [vmem:[#allocation2 + $0x78] sm:$0xff]
        %v210 = vld [vmem:[#allocation2 + $0x80] sm:$0xff]
        %v211 = vld [vmem:[#allocation2 + $0x88] sm:$0xff]
        %v212 = vld [vmem:[#allocation2 + $0x90] sm:$0xff]
        %v213 = vld [vmem:[#allocation2 + $0x98] sm:$0xff]
        %v214 = vld [vmem:[#allocation2 + $0xa0] sm:$0xff]
        %v215 = vld [vmem:[#allocation2 + $0xa8] sm:$0xff]
        %v216 = vld [vmem:[#allocation2 + $0xb0] sm:$0xff]
        %v217 = vld [vmem:[#allocation2 + $0xb8] sm:$0xff]
        %v218 = vld [vmem:[#allocation2 + $0xc0] sm:$0xff]
        %v219 = vld [vmem:[#allocation2 + $0xc8] sm:$0xff]
        %v220 = vld [vmem:[#allocation2 + $0xd0] sm:$0xff]
        %v221 = vld [vmem:[#allocation2 + $0xd8] sm:$0xff]
        %v222 = vld [vmem:[#allocation2 + $0xe0] sm:$0xff]
        %v223 = vld [vmem:[#allocation2 + $0xe8] sm:$0xff]
        %v224 = vld [vmem:[#allocation2 + $0xf0] sm:$0xff]
        %v225 = vld [vmem:[#allocation2 + $0xf8] sm:$0xff]
        %v226 = vld [vmem:[#allocation2 + $0x100] sm:$0xff]
        %v227 = vld [vmem:[#allocation2 + $0x108] sm:$0xff]
        %v228 = vld [vmem:[#allocation2 + $0x110] sm:$0xff]
        %v229 = vld [vmem:[#allocation2 + $0x118] sm:$0xff]
        %v230 = vld [vmem:[#allocation2 + $0x120] sm:$0xff]
        %v231 = vld [vmem:[#allocation2 + $0x128] sm:$0xff]
        %v232 = vld [vmem:[#allocation2 + $0x130] sm:$0xff]
        %v233 = vld [vmem:[#allocation2 + $0x138] sm:$0xff]
        %v234 = vld [vmem:[#allocation2 + $0x140] sm:$0xff]
        %v235 = vld [vmem:[#allocation2 + $0x148] sm:$0xff]
        %v236 = vld [vmem:[#allocation2 + $0x150] sm:$0xff]
        %v237 = vld [vmem:[#allocation2 + $0x158] sm:$0xff]
        %v238 = vld [vmem:[#allocation2 + $0x160] sm:$0xff]
        %v239 = vld [vmem:[#allocation2 + $0x168] sm:$0xff]
        %v240 = vld [vmem:[#allocation2 + $0x170] sm:$0xff]
        %v241 = vld [vmem:[#allocation2 + $0x178] sm:$0xff]
        %v242 = vld [vmem:[#allocation2 + $0x180] sm:$0xff]
        %v243 = vld [vmem:[#allocation2 + $0x188] sm:$0xff]
        %v244 = vld [vmem:[#allocation2 + $0x190] sm:$0xff]
        %v245 = vld [vmem:[#allocation2 + $0x198] sm:$0xff]
        %v246 = vld [vmem:[#allocation2 + $0x1a0] sm:$0xff]
        %v247 = vld [vmem:[#allocation2 + $0x1a8] sm:$0xff]
        %v248 = vld [vmem:[#allocation2 + $0x1b0] sm:$0xff]
        %v249 = vld [vmem:[#allocation2 + $0x1b8] sm:$0xff]
        %v250 = vld [vmem:[#allocation2 + $0x1c0] sm:$0xff]
        %v251 = vld [vmem:[#allocation2 + $0x1c8] sm:$0xff]
        %v252 = vld [vmem:[#allocation2 + $0x1d0] sm:$0xff]
        %v253 = vld [vmem:[#allocation2 + $0x1d8] sm:$0xff]
        %v254 = vld [vmem:[#allocation2 + $0x1e0] sm:$0xff]
        %v255 = vld [vmem:[#allocation2 + $0x1e8] sm:$0xff]
        %v256 = vld [vmem:[#allocation2 + $0x1f0] sm:$0xff]
        %v257 = vld [vmem:[#allocation2 + $0x1f8] sm:$0xff]
        %v258 = vld [vmem:[#allocation2 + $0x200] sm:$0xff]
        %v259 = vld [vmem:[#allocation2 + $0x208] sm:$0xff]
        %v260 = vld [vmem:[#allocation2 + $0x210] sm:$0xff]
        %v261 = vld [vmem:[#allocation2 + $0x218] sm:$0xff]
        %v262 = vld [vmem:[#allocation2 + $0x220] sm:$0xff]
        %v263 = vld [vmem:[#allocation2 + $0x228] sm:$0xff]
        %v264 = vld [vmem:[#allocation2 + $0x230] sm:$0xff]
        %v265 = vld [vmem:[#allocation2 + $0x238] sm:$0xff]
        %v266 = vld [vmem:[#allocation2 + $0x240] sm:$0xff]
        %v267 = vld [vmem:[#allocation2 + $0x248] sm:$0xff]
        %v268 = vld [vmem:[#allocation2 + $0x250] sm:$0xff]
        %v269 = vld [vmem:[#allocation2 + $0x258] sm:$0xff]
        %v270 = vld [vmem:[#allocation2 + $0x260] sm:$0xff]
        %v271 = vld [vmem:[#allocation2 + $0x268] sm:$0xff]
        %v272 = vld [vmem:[#allocation2 + $0x270] sm:$0xff]
        %v273 = vld [vmem:[#allocation2 + $0x278] sm:$0xff]
        %v274 = vld [vmem:[#allocation2 + $0x280] sm:$0xff]
        %v275 = vld [vmem:[#allocation2 + $0x288] sm:$0xff]
        %v276 = vld [vmem:[#allocation2 + $0x290] sm:$0xff]
        %v277 = vld [vmem:[#allocation2 + $0x298] sm:$0xff]
        %v278 = vld [vmem:[#allocation2 + $0x2a0] sm:$0xff]
        %v279 = vld [vmem:[#allocation2 + $0x2a8] sm:$0xff]
        %v280 = vld [vmem:[#allocation2 + $0x2b0] sm:$0xff]
        %v281 = vld [vmem:[#allocation2 + $0x2b8] sm:$0xff]
        %v282 = vld [vmem:[#allocation2 + $0x2c0] sm:$0xff]
        %v283 = vld [vmem:[#allocation2 + $0x2c8] sm:$0xff]
        %v284 = vld [vmem:[#allocation2 + $0x2d0] sm:$0xff]
        %v285 = vld [vmem:[#allocation2 + $0x2d8] sm:$0xff]
        %v286 = vld [vmem:[#allocation2 + $0x2e0] sm:$0xff]
        %v287 = vld [vmem:[#allocation2 + $0x2e8] sm:$0xff]
        %v288 = vld [vmem:[#allocation2 + $0x2f0] sm:$0xff]
        %v289 = vld [vmem:[#allocation2 + $0x2f8] sm:$0xff]
        %v290 = vld [vmem:[#allocation2 + $0x300] sm:$0xff]
        %v291 = vld [vmem:[#allocation2 + $0x308] sm:$0xff]
        %v292 = vld [vmem:[#allocation2 + $0x310] sm:$0xff]
        %v293 = vld [vmem:[#allocation2 + $0x318] sm:$0xff]
        %v294 = vld [vmem:[#allocation2 + $0x320] sm:$0xff]
        %v295 = vld [vmem:[#allocation2 + $0x328] sm:$0xff]
        %v296 = vld [vmem:[#allocation2 + $0x330] sm:$0xff]
        %v297 = vld [vmem:[#allocation2 + $0x338] sm:$0xff]
        %v298 = vld [vmem:[#allocation2 + $0x340] sm:$0xff]
        %v299 = vld [vmem:[#allocation2 + $0x348] sm:$0xff]
        %v300 = vld [vmem:[#allocation2 + $0x350] sm:$0xff]
        %v301 = vld [vmem:[#allocation2 + $0x358] sm:$0xff]
        %v302 = vld [vmem:[#allocation2 + $0x360] sm:$0xff]
        %v303 = vld [vmem:[#allocation2 + $0x368] sm:$0xff]
        %v304 = vld [vmem:[#allocation2 + $0x370] sm:$0xff]
        %v305 = vld [vmem:[#allocation2 + $0x378] sm:$0xff]
        %v306 = vld [vmem:[#allocation2 + $0x380] sm:$0xff]
        %v307 = vld [vmem:[#allocation2 + $0x388] sm:$0xff]
        %v308 = vld [vmem:[#allocation2 + $0x390] sm:$0xff]
        %v309 = vld [vmem:[#allocation2 + $0x398] sm:$0xff]
        %v310 = vld [vmem:[#allocation2 + $0x3a0] sm:$0xff]
        %v311 = vld [vmem:[#allocation2 + $0x3a8] sm:$0xff]
        %v312 = vld [vmem:[#allocation2 + $0x3b0] sm:$0xff]
        %v313 = vld [vmem:[#allocation2 + $0x3b8] sm:$0xff]
        %v314 = vld [vmem:[#allocation2 + $0x3c0] sm:$0xff]
        %v315 = vld [vmem:[#allocation2 + $0x3c8] sm:$0xff]
        %v316 = vld [vmem:[#allocation2 + $0x3d0] sm:$0xff]
        %v317 = vld [vmem:[#allocation2 + $0x3d8] sm:$0xff]
        %v318 = vld [vmem:[#allocation2 + $0x3e0] sm:$0xff]
        %v319 = vld [vmem:[#allocation2 + $0x3e8] sm:$0xff]
        %v320 = vld [vmem:[#allocation2 + $0x3f0] sm:$0xff]
        %v321 = vld [vmem:[#allocation2 + $0x3f8] sm:$0xff]
        %v322 = vld [vmem:[#allocation2 + $0x400] sm:$0xff]
        %v323 = vld [vmem:[#allocation2 + $0x408] sm:$0xff]
        %v324 = vld [vmem:[#allocation2 + $0x410] sm:$0xff]
        %v325 = vld [vmem:[#allocation2 + $0x418] sm:$0xff]
        %v326 = vld [vmem:[#allocation2 + $0x420] sm:$0xff]
        %v327 = vld [vmem:[#allocation2 + $0x428] sm:$0xff]
        %v328 = vld [vmem:[#allocation2 + $0x430] sm:$0xff]
        %v329 = vld [vmem:[#allocation2 + $0x438] sm:$0xff]
        %v330 = vld [vmem:[#allocation2 + $0x440] sm:$0xff]
        %v331 = vld [vmem:[#allocation2 + $0x448] sm:$0xff]
        %v332 = vld [vmem:[#allocation2 + $0x450] sm:$0xff]
        %v333 = vld [vmem:[#allocation2 + $0x458] sm:$0xff]
        %v334 = vld [vmem:[#allocation2 + $0x460] sm:$0xff]
        %v335 = vld [vmem:[#allocation2 + $0x468] sm:$0xff]
        %v336 = vld [vmem:[#allocation2 + $0x470] sm:$0xff]
        %v337 = vld [vmem:[#allocation2 + $0x478] sm:$0xff]
        %v338 = vld [vmem:[#allocation2 + $0x480] sm:$0xff]
        %v339 = vld [vmem:[#allocation2 + $0x488] sm:$0xff]
        %v340 = vld [vmem:[#allocation2 + $0x490] sm:$0xff]
        %v341 = vld [vmem:[#allocation2 + $0x498] sm:$0xff]
        %v342 = vld [vmem:[#allocation2 + $0x4a0] sm:$0xff]
        %v343 = vld [vmem:[#allocation2 + $0x4a8] sm:$0xff]
        %v344 = vld [vmem:[#allocation2 + $0x4b0] sm:$0xff]
        %v345 = vld [vmem:[#allocation2 + $0x4b8] sm:$0xff]
        %v346 = vld [vmem:[#allocation2 + $0x4c0] sm:$0xff]
        %v347 = vld [vmem:[#allocation2 + $0x4c8] sm:$0xff]
        %v348 = vld [vmem:[#allocation2 + $0x4d0] sm:$0xff]
        %v349 = vld [vmem:[#allocation2 + $0x4d8] sm:$0xff]
        %v350 = vld [vmem:[#allocation2 + $0x4e0] sm:$0xff]
        %v351 = vld [vmem:[#allocation2 + $0x4e8] sm:$0xff]
        %v352 = vld [vmem:[#allocation2 + $0x4f0] sm:$0xff]
        %v353 = vld [vmem:[#allocation2 + $0x4f8] sm:$0xff]
        %v354 = vld [vmem:[#allocation2 + $0x500] sm:$0xff]
        %v355 = vld [vmem:[#allocation2 + $0x508] sm:$0xff]
        %v356 = vld [vmem:[#allocation2 + $0x510] sm:$0xff]
        %v357 = vld [vmem:[#allocation2 + $0x518] sm:$0xff]
        %v358 = vld [vmem:[#allocation2 + $0x520] sm:$0xff]
        %v359 = vld [vmem:[#allocation2 + $0x528] sm:$0xff]
        %v360 = vld [vmem:[#allocation2 + $0x530] sm:$0xff]
        %v361 = vld [vmem:[#allocation2 + $0x538] sm:$0xff]
        %v362 = vld [vmem:[#allocation2 + $0x540] sm:$0xff]
        %v363 = vld [vmem:[#allocation2 + $0x548] sm:$0xff]
        %v364 = vld [vmem:[#allocation2 + $0x550] sm:$0xff]
        %v365 = vld [vmem:[#allocation2 + $0x558] sm:$0xff]
        %v366 = vld [vmem:[#allocation2 + $0x560] sm:$0xff]
        %v367 = vld [vmem:[#allocation2 + $0x568] sm:$0xff]
        %v368 = vld [vmem:[#allocation2 + $0x570] sm:$0xff]
        %v369 = vld [vmem:[#allocation2 + $0x578] sm:$0xff]
        %v370 = vld [vmem:[#allocation2 + $0x580] sm:$0xff]
        %v371 = vld [vmem:[#allocation2 + $0x588] sm:$0xff]
        %v372 = vld [vmem:[#allocation2 + $0x590] sm:$0xff]
        %v373 = vld [vmem:[#allocation2 + $0x598] sm:$0xff]
        %v374 = vld [vmem:[#allocation2 + $0x5a0] sm:$0xff]
        %v375 = vld [vmem:[#allocation2 + $0x5a8] sm:$0xff]
        %v376 = vld [vmem:[#allocation2 + $0x5b0] sm:$0xff]
        %v377 = vld [vmem:[#allocation2 + $0x5b8] sm:$0xff]
        %v378 = vld [vmem:[#allocation2 + $0x5c0] sm:$0xff]
        %v379 = vld [vmem:[#allocation2 + $0x5c8] sm:$0xff]
        %v380 = vld [vmem:[#allocation2 + $0x5d0] sm:$0xff]
        %v381 = vld [vmem:[#allocation2 + $0x5d8] sm:$0xff]
        %v382 = vld [vmem:[#allocation2 + $0x5e0] sm:$0xff]
        %v383 = vld [vmem:[#allocation2 + $0x5e8] sm:$0xff]
        %v384 = vld [vmem:[#allocation2 + $0x5f0] sm:$0xff]
        %v385 = vld [vmem:[#allocation2 + $0x5f8] sm:$0xff]
        %v386 = vld [vmem:[#allocation2 + $0x600] sm:$0xff]
        %v387 = vld [vmem:[#allocation2 + $0x608] sm:$0xff]
        %v388 = vld [vmem:[#allocation2 + $0x610] sm:$0xff]
        %v389 = vld [vmem:[#allocation2 + $0x618] sm:$0xff]
        %v390 = vld [vmem:[#allocation2 + $0x620] sm:$0xff]
        %v391 = vld [vmem:[#allocation2 + $0x628] sm:$0xff]
        %v392 = vld [vmem:[#allocation2 + $0x630] sm:$0xff]
        %v393 = vld [vmem:[#allocation2 + $0x638] sm:$0xff]
        %v394 = vld [vmem:[#allocation2 + $0x640] sm:$0xff]
        %v395 = vld [vmem:[#allocation2 + $0x648] sm:$0xff]
        %v396 = vld [vmem:[#allocation2 + $0x650] sm:$0xff]
        %v397 = vld [vmem:[#allocation2 + $0x658] sm:$0xff]
        %v398 = vld [vmem:[#allocation2 + $0x660] sm:$0xff]
        %v399 = vld [vmem:[#allocation2 + $0x668] sm:$0xff]
        %v400 = vld [vmem:[#allocation2 + $0x670] sm:$0xff]
        %v401 = vld [vmem:[#allocation2 + $0x678] sm:$0xff]
        %v402 = vld [vmem:[#allocation2 + $0x680] sm:$0xff]
        %v403 = vld [vmem:[#allocation2 + $0x688] sm:$0xff]
        %v404 = vld [vmem:[#allocation2 + $0x690] sm:$0xff]
        %v405 = vld [vmem:[#allocation2 + $0x698] sm:$0xff]
        %v406 = vld [vmem:[#allocation2 + $0x6a0] sm:$0xff]
        %v407 = vld [vmem:[#allocation2 + $0x6a8] sm:$0xff]
        %v408 = vld [vmem:[#allocation2 + $0x6b0] sm:$0xff]
        %v409 = vld [vmem:[#allocation2 + $0x6b8] sm:$0xff]
        %v410 = vld [vmem:[#allocation2 + $0x6c0] sm:$0xff]
        %v411 = vld [vmem:[#allocation2 + $0x6c8] sm:$0xff]
        %v412 = vld [vmem:[#allocation2 + $0x6d0] sm:$0xff]
        %v413 = vld [vmem:[#allocation2 + $0x6d8] sm:$0xff]
        %v414 = vld [vmem:[#allocation2 + $0x6e0] sm:$0xff]
        %v415 = vld [vmem:[#allocation2 + $0x6e8] sm:$0xff]
        %v416 = vld [vmem:[#allocation2 + $0x6f0] sm:$0xff]
        %v417 = vld [vmem:[#allocation2 + $0x6f8] sm:$0xff]
        %v418 = vld [vmem:[#allocation2 + $0x700] sm:$0xff]
        %v419 = vld [vmem:[#allocation2 + $0x708] sm:$0xff]
        %v420 = vld [vmem:[#allocation2 + $0x710] sm:$0xff]
        %v421 = vld [vmem:[#allocation2 + $0x718] sm:$0xff]
        %v422 = vld [vmem:[#allocation2 + $0x720] sm:$0xff]
        %v423 = vld [vmem:[#allocation2 + $0x728] sm:$0xff]
        %v424 = vld [vmem:[#allocation2 + $0x730] sm:$0xff]
        %v425 = vld [vmem:[#allocation2 + $0x738] sm:$0xff]
        %v426 = vld [vmem:[#allocation2 + $0x740] sm:$0xff]
        %v427 = vld [vmem:[#allocation2 + $0x748] sm:$0xff]
        %v428 = vld [vmem:[#allocation2 + $0x750] sm:$0xff]
        %v429 = vld [vmem:[#allocation2 + $0x758] sm:$0xff]
        %v430 = vld [vmem:[#allocation2 + $0x760] sm:$0xff]
        %v431 = vld [vmem:[#allocation2 + $0x768] sm:$0xff]
        %v432 = vld [vmem:[#allocation2 + $0x770] sm:$0xff]
        %v433 = vld [vmem:[#allocation2 + $0x778] sm:$0xff]
        %v434 = vld [vmem:[#allocation2 + $0x780] sm:$0xff]
        %v435 = vld [vmem:[#allocation2 + $0x788] sm:$0xff]
        %v436 = vld [vmem:[#allocation2 + $0x790] sm:$0xff]
        %v437 = vld [vmem:[#allocation2 + $0x798] sm:$0xff]
        %v438 = vld [vmem:[#allocation2 + $0x7a0] sm:$0xff]
        %v439 = vld [vmem:[#allocation2 + $0x7a8] sm:$0xff]
        %v440 = vld [vmem:[#allocation2 + $0x7b0] sm:$0xff]
        %v441 = vld [vmem:[#allocation2 + $0x7b8] sm:$0xff]
        %v442 = vld [vmem:[#allocation2 + $0x7c0] sm:$0xff]
        %v443 = vld [vmem:[#allocation2 + $0x7c8] sm:$0xff]
        %v444 = vld [vmem:[#allocation2 + $0x7d0] sm:$0xff]
        %v445 = vld [vmem:[#allocation2 + $0x7d8] sm:$0xff]
        %v446 = vld [vmem:[#allocation2 + $0x7e0] sm:$0xff]
        %v447 = vld [vmem:[#allocation2 + $0x7e8] sm:$0xff]
        %v448 = vld [vmem:[#allocation2 + $0x7f0] sm:$0xff]
        %v449 = vld [vmem:[#allocation2 + $0x7f8] sm:$0xff]
        %v450 = vld [vmem:[#allocation2 + $0x800] sm:$0xff]
        %v451 = vld [vmem:[#allocation2 + $0x808] sm:$0xff]
        %v452 = vld [vmem:[#allocation2 + $0x810] sm:$0xff]
        %v453 = vld [vmem:[#allocation2 + $0x818] sm:$0xff]
        %v454 = vld [vmem:[#allocation2 + $0x820] sm:$0xff]
        %v455 = vld [vmem:[#allocation2 + $0x828] sm:$0xff]
        %v456 = vld [vmem:[#allocation2 + $0x830] sm:$0xff]
        %v457 = vld [vmem:[#allocation2 + $0x838] sm:$0xff]
        %v458 = vld [vmem:[#allocation2 + $0x840] sm:$0xff]
        %v459 = vld [vmem:[#allocation2 + $0x848] sm:$0xff]
        %v460 = vld [vmem:[#allocation2 + $0x850] sm:$0xff]
        %v461 = vld [vmem:[#allocation2 + $0x858] sm:$0xff]
        %v462 = vld [vmem:[#allocation2 + $0x860] sm:$0xff]
        %v463 = vld [vmem:[#allocation2 + $0x868] sm:$0xff]
        %v464 = vld [vmem:[#allocation2 + $0x870] sm:$0xff]
        %v465 = vld [vmem:[#allocation2 + $0x878] sm:$0xff]
        %v466 = vld [vmem:[#allocation2 + $0x880] sm:$0xff]
        %v467 = vld [vmem:[#allocation2 + $0x888] sm:$0xff]
        %v468 = vld [vmem:[#allocation2 + $0x890] sm:$0xff]
        %v469 = vld [vmem:[#allocation2 + $0x898] sm:$0xff]
        %v470 = vld [vmem:[#allocation2 + $0x8a0] sm:$0xff]
        %v471 = vld [vmem:[#allocation2 + $0x8a8] sm:$0xff]
        %v472 = vld [vmem:[#allocation2 + $0x8b0] sm:$0xff]
        %v473 = vld [vmem:[#allocation2 + $0x8b8] sm:$0xff]
        %v474 = vld [vmem:[#allocation2 + $0x8c0] sm:$0xff]
        %v475 = vld [vmem:[#allocation2 + $0x8c8] sm:$0xff]
        %v476 = vld [vmem:[#allocation2 + $0x8d0] sm:$0xff]
        %v477 = vld [vmem:[#allocation2 + $0x8d8] sm:$0xff]
        %v478 = vld [vmem:[#allocation2 + $0x8e0] sm:$0xff]
        %v479 = vld [vmem:[#allocation2 + $0x8e8] sm:$0xff]
        %v480 = vld [vmem:[#allocation2 + $0x8f0] sm:$0xff]
        %v481 = vld [vmem:[#allocation2 + $0x8f8] sm:$0xff]
        %v482 = vld [vmem:[#allocation2 + $0x900] sm:$0xff]
        %v483 = vld [vmem:[#allocation2 + $0x908] sm:$0xff]
        %v484 = vld [vmem:[#allocation2 + $0x910] sm:$0xff]
        %v485 = vld [vmem:[#allocation2 + $0x918] sm:$0xff]
        %v486 = vld [vmem:[#allocation2 + $0x920] sm:$0xff]
        %v487 = vld [vmem:[#allocation2 + $0x928] sm:$0xff]
        %v488 = vld [vmem:[#allocation2 + $0x930] sm:$0xff]
        %v489 = vld [vmem:[#allocation2 + $0x938] sm:$0xff]
        %v490 = vld [vmem:[#allocation2 + $0x940] sm:$0xff]
        %v491 = vld [vmem:[#allocation2 + $0x948] sm:$0xff]
        %v492 = vld [vmem:[#allocation2 + $0x950] sm:$0xff]
        %v493 = vld [vmem:[#allocation2 + $0x958] sm:$0xff]
        %v494 = vld [vmem:[#allocation2 + $0x960] sm:$0xff]
        %v495 = vld [vmem:[#allocation2 + $0x968] sm:$0xff]
        %v496 = vld [vmem:[#allocation2 + $0x970] sm:$0xff]
        %v497 = vld [vmem:[#allocation2 + $0x978] sm:$0xff]
        %v498 = vld [vmem:[#allocation2 + $0x980] sm:$0xff]
        %v499 = vld [vmem:[#allocation2 + $0x988] sm:$0xff]
        %v500 = vld [vmem:[#allocation2 + $0x990] sm:$0xff]
        %v501 = vld [vmem:[#allocation2 + $0x998] sm:$0xff]
        %v502 = vld [vmem:[#allocation2 + $0x9a0] sm:$0xff]
        %v503 = vld [vmem:[#allocation2 + $0x9a8] sm:$0xff]
        %v504 = vld [vmem:[#allocation2 + $0x9b0] sm:$0xff]
        %v505 = vld [vmem:[#allocation2 + $0x9b8] sm:$0xff]
        %v506 = vld [vmem:[#allocation2 + $0x9c0] sm:$0xff]
        %v507 = vld [vmem:[#allocation2 + $0x9c8] sm:$0xff]
        %v508 = vld [vmem:[#allocation2 + $0x9d0] sm:$0xff]
        %v509 = vld [vmem:[#allocation2 + $0x9d8] sm:$0xff]
        %v510 = vld [vmem:[#allocation2 + $0x9e0] sm:$0xff]
        %v511 = vld [vmem:[#allocation2 + $0x9e8] sm:$0xff]
        %v512 = vld [vmem:[#allocation2 + $0x9f0] sm:$0xff]
        %v513 = vld [vmem:[#allocation2 + $0x9f8] sm:$0xff]
        %v514 = vld [vmem:[#allocation2 + $0xa00] sm:$0xff]
        %v515 = vld [vmem:[#allocation2 + $0xa08] sm:$0xff]
        %v516 = vld [vmem:[#allocation2 + $0xa10] sm:$0xff]
        %v517 = vld [vmem:[#allocation2 + $0xa18] sm:$0xff]
        %v518 = vld [vmem:[#allocation2 + $0xa20] sm:$0xff]
        %v519 = vld [vmem:[#allocation2 + $0xa28] sm:$0xff]
        %v520 = vld [vmem:[#allocation2 + $0xa30] sm:$0xff]
        %v521 = vld [vmem:[#allocation2 + $0xa38] sm:$0xff]
        %v522 = vld [vmem:[#allocation2 + $0xa40] sm:$0xff]
        %v523 = vld [vmem:[#allocation2 + $0xa48] sm:$0xff]
        %v524 = vld [vmem:[#allocation2 + $0xa50] sm:$0xff]
        %v525 = vld [vmem:[#allocation2 + $0xa58] sm:$0xff]
        %v526 = vld [vmem:[#allocation2 + $0xa60] sm:$0xff]
        %v527 = vld [vmem:[#allocation2 + $0xa68] sm:$0xff]
        %v528 = vld [vmem:[#allocation2 + $0xa70] sm:$0xff]
        %v529 = vld [vmem:[#allocation2 + $0xa78] sm:$0xff]
        %v530 = vld [vmem:[#allocation2 + $0xa80] sm:$0xff]
        %v531 = vld [vmem:[#allocation2 + $0xa88] sm:$0xff]
        %v532 = vld [vmem:[#allocation2 + $0xa90] sm:$0xff]
        %v533 = vld [vmem:[#allocation2 + $0xa98] sm:$0xff]
        %v534 = vld [vmem:[#allocation2 + $0xaa0] sm:$0xff]
        %v535 = vld [vmem:[#allocation2 + $0xaa8] sm:$0xff]
        %v536 = vld [vmem:[#allocation2 + $0xab0] sm:$0xff]
        %v537 = vld [vmem:[#allocation2 + $0xab8] sm:$0xff]
        %v538 = vld [vmem:[#allocation2 + $0xac0] sm:$0xff]
        %v539 = vld [vmem:[#allocation2 + $0xac8] sm:$0xff]
        %v540 = vld [vmem:[#allocation2 + $0xad0] sm:$0xff]
        %v541 = vld [vmem:[#allocation2 + $0xad8] sm:$0xff]
        %v542 = vld [vmem:[#allocation2 + $0xae0] sm:$0xff]
        %v543 = vld [vmem:[#allocation2 + $0xae8] sm:$0xff]
        %v544 = vld [vmem:[#allocation2 + $0xaf0] sm:$0xff]
        %v545 = vld [vmem:[#allocation2 + $0xaf8] sm:$0xff]
        %v546 = vld [vmem:[#allocation2 + $0xb00] sm:$0xff]
        %v547 = vld [vmem:[#allocation2 + $0xb08] sm:$0xff]
        %v548 = vld [vmem:[#allocation2 + $0xb10] sm:$0xff]
        %v549 = vld [vmem:[#allocation2 + $0xb18] sm:$0xff]
        %v550 = vld [vmem:[#allocation2 + $0xb20] sm:$0xff]
        %v551 = vld [vmem:[#allocation2 + $0xb28] sm:$0xff]
        %v552 = vld [vmem:[#allocation2 + $0xb30] sm:$0xff]
        %v553 = vld [vmem:[#allocation2 + $0xb38] sm:$0xff]
        %v554 = vld [vmem:[#allocation2 + $0xb40] sm:$0xff]
        %v555 = vld [vmem:[#allocation2 + $0xb48] sm:$0xff]
        %v556 = vld [vmem:[#allocation2 + $0xb50] sm:$0xff]
        %v557 = vld [vmem:[#allocation2 + $0xb58] sm:$0xff]
        %v558 = vld [vmem:[#allocation2 + $0xb60] sm:$0xff]
        %v559 = vld [vmem:[#allocation2 + $0xb68] sm:$0xff]
        %v560 = vld [vmem:[#allocation2 + $0xb70] sm:$0xff]
        %v561 = vld [vmem:[#allocation2 + $0xb78] sm:$0xff]
        %v562 = vld [vmem:[#allocation2 + $0xb80] sm:$0xff]
        %v563 = vld [vmem:[#allocation2 + $0xb88] sm:$0xff]
        %v564 = vld [vmem:[#allocation2 + $0xb90] sm:$0xff]
        %v565 = vld [vmem:[#allocation2 + $0xb98] sm:$0xff]
        %v566 = vld [vmem:[#allocation2 + $0xba0] sm:$0xff]
        %v567 = vld [vmem:[#allocation2 + $0xba8] sm:$0xff]
        %v568 = vld [vmem:[#allocation2 + $0xbb0] sm:$0xff]
        %v569 = vld [vmem:[#allocation2 + $0xbb8] sm:$0xff]
        %v570 = vld [vmem:[#allocation2 + $0xbc0] sm:$0xff]
        %v571 = vld [vmem:[#allocation2 + $0xbc8] sm:$0xff]
        %v572 = vld [vmem:[#allocation2 + $0xbd0] sm:$0xff]
        %v573 = vld [vmem:[#allocation2 + $0xbd8] sm:$0xff]
        %v574 = vld [vmem:[#allocation2 + $0xbe0] sm:$0xff]
        %v575 = vld [vmem:[#allocation2 + $0xbe8] sm:$0xff]
        %v576 = vld [vmem:[#allocation2 + $0xbf0] sm:$0xff]
        %v577 = vld [vmem:[#allocation2 + $0xbf8] sm:$0xff]
        %578 = vmatprep.subr.mxu0 %v285
        %579 = vmatpush1.msra.mxu0 %v284
        %580 = vmatprep.subr.mxu0 %v279
        %581 = vmatpush1.msra.mxu0 %v278
        %582 = vmatprep.subr.mxu0 %v273
        %583 = vmatpush1.msra.mxu0 %v272
        %584 = vmatprep.subr.mxu0 %v267
        %585 = vmatpush1.msra.mxu0 %v266
        %586 = vmatprep.subr.mxu0 %v261
        %587 = vmatpush1.msra.mxu0 %v260
        %588 = vmatprep.subr.mxu0 %v255
        %589 = vmatpush1.msra.mxu0 %v254
        %590 = vmatprep.subr.mxu0 %v249
        %591 = vmatpush1.msra.mxu0 %v248
        %592 = vmatprep.subr.mxu0 %v243
        %593 = vmatpush1.msra.mxu0 %v242
        %594 = vmatprep.subr.mxu0 %v237
        %595 = vmatpush1.msra.mxu0 %v236
        %596 = vmatprep.subr.mxu0 %v231
        %597 = vmatpush1.msra.mxu0 %v230
        %598 = vmatprep.subr.mxu0 %v225
        %599 = vmatpush1.msra.mxu0 %v224
        %600 = vmatprep.subr.mxu0 %v219
        %601 = vmatpush1.msra.mxu0 %v218
        %602 = vmatprep.subr.mxu0 %v213
        %603 = vmatpush1.msra.mxu0 %v212
        %604 = vmatprep.subr.mxu0 %v207
        %605 = vmatpush1.msra.mxu0 %v206
        %606 = vmatprep.subr.mxu0 %v201
        %607 = vmatpush1.msra.mxu0 %v200
        %608 = vmatprep.subr.mxu0 %v195
        %609 = vmatpush1.msra.mxu0 %v194
        %610 = vmatprep.subr.mxu0 %v381
        %611 = vmatpush2.msra.mxu0 %v380
        %612 = vmatprep.subr.mxu0 %v375
        %613 = vmatpush2.msra.mxu0 %v374
        %614 = vmatprep.subr.mxu0 %v369
        %615 = vmatpush2.msra.mxu0 %v368
        %616 = vmatprep.subr.mxu0 %v363
        %617 = vmatpush2.msra.mxu0 %v362
        %618 = vmatprep.subr.mxu0 %v357
        %619 = vmatpush2.msra.mxu0 %v356
        %620 = vmatprep.subr.mxu0 %v351
        %621 = vmatpush2.msra.mxu0 %v350
        %622 = vmatprep.subr.mxu0 %v345
        %623 = vmatpush2.msra.mxu0 %v344
        %624 = vmatprep.subr.mxu0 %v339
        %625 = vmatpush2.msra.mxu0 %v338
        %626 = vmatprep.subr.mxu0 %v333
        %627 = vmatpush2.msra.mxu0 %v332
        %628 = vmatprep.subr.mxu0 %v327
        %629 = vmatpush2.msra.mxu0 %v326
        %630 = vmatprep.subr.mxu0 %v321
        %631 = vmatpush2.msra.mxu0 %v320
        %632 = vmatprep.subr.mxu0 %v315
        %633 = vmatpush2.msra.mxu0 %v314
        %634 = vmatprep.subr.mxu0 %v309
        %635 = vmatpush2.msra.mxu0 %v308
        %636 = vmatprep.subr.mxu0 %v303
        %637 = vmatpush2.msra.mxu0 %v302
        %638 = vmatprep.subr.mxu0 %v297
        %639 = vmatpush2.msra.mxu0 %v296
        %640 = vmatprep.subr.mxu0 %v291
        %641 = vmatpush2.msra.mxu0 %v290
        %642 = vmatprep.mubr.f32.mxu0 %v187
        %643 = vmatmul.mubr.f32.gmra.mxu0 %v186
        %v644 = vpop.f32.mrf.mxu0
        %v645 = vadd.f32 0.0, %v644
        %v646 = vpop.f32.mrf.mxu0
        %v647 = vadd.f32 0.0, %v646
        %648 = vmatprep.mubr.f32.mxu0 %v191
        %649 = vmatmul.mubr.f32.gmra.mxu0 %v190
        %v650 = vpop.f32.mrf.mxu0
        %v651 = vadd.f32 0.0, %v650
        %v652 = vpop.f32.mrf.mxu0
        %v653 = vadd.f32 0.0, %v652
        %654 = vdwg.mxu0
        %655 = vmatprep.subr.mxu0 %v477
        %656 = vmatpush1.msra.mxu0 %v476
        %657 = vmatprep.subr.mxu0 %v471
        %658 = vmatpush1.msra.mxu0 %v470
        %659 = vmatprep.subr.mxu0 %v465
        %660 = vmatpush1.msra.mxu0 %v464
        %661 = vmatprep.subr.mxu0 %v459
        %662 = vmatpush1.msra.mxu0 %v458
        %663 = vmatprep.subr.mxu0 %v453
        %664 = vmatpush1.msra.mxu0 %v452
        %665 = vmatprep.subr.mxu0 %v447
        %666 = vmatpush1.msra.mxu0 %v446
        %667 = vmatprep.subr.mxu0 %v441
        %668 = vmatpush1.msra.mxu0 %v440
        %669 = vmatprep.subr.mxu0 %v435
        %670 = vmatpush1.msra.mxu0 %v434
        %671 = vmatprep.subr.mxu0 %v429
        %672 = vmatpush1.msra.mxu0 %v428
        %673 = vmatprep.subr.mxu0 %v423
        %674 = vmatpush1.msra.mxu0 %v422
        %675 = vmatprep.subr.mxu0 %v417
        %676 = vmatpush1.msra.mxu0 %v416
        %677 = vmatprep.subr.mxu0 %v411
        %678 = vmatpush1.msra.mxu0 %v410
        %679 = vmatprep.subr.mxu0 %v405
        %680 = vmatpush1.msra.mxu0 %v404
        %681 = vmatprep.subr.mxu0 %v399
        %682 = vmatpush1.msra.mxu0 %v398
        %683 = vmatprep.subr.mxu0 %v393
        %684 = vmatpush1.msra.mxu0 %v392
        %685 = vmatprep.subr.mxu0 %v387
        %686 = vmatpush1.msra.mxu0 %v386
        %687 = vmatprep.subr.mxu0 %v573
        %688 = vmatpush2.msra.mxu0 %v572
        %689 = vmatprep.subr.mxu0 %v567
        %690 = vmatpush2.msra.mxu0 %v566
        %691 = vmatprep.subr.mxu0 %v561
        %692 = vmatpush2.msra.mxu0 %v560
        %693 = vmatprep.subr.mxu0 %v555
        %694 = vmatpush2.msra.mxu0 %v554
        %695 = vmatprep.subr.mxu0 %v549
        %696 = vmatpush2.msra.mxu0 %v548
        %697 = vmatprep.subr.mxu0 %v543
        %698 = vmatpush2.msra.mxu0 %v542
        %699 = vmatprep.subr.mxu0 %v537
        %700 = vmatpush2.msra.mxu0 %v536
        %701 = vmatprep.subr.mxu0 %v531
        %702 = vmatpush2.msra.mxu0 %v530
        %703 = vmatprep.subr.mxu0 %v525
        %704 = vmatpush2.msra.mxu0 %v524
        %705 = vmatprep.subr.mxu0 %v519
        %706 = vmatpush2.msra.mxu0 %v518
        %707 = vmatprep.subr.mxu0 %v513
        %708 = vmatpush2.msra.mxu0 %v512
        %709 = vmatprep.subr.mxu0 %v507
        %710 = vmatpush2.msra.mxu0 %v506
        %711 = vmatprep.subr.mxu0 %v501
        %712 = vmatpush2.msra.mxu0 %v500
        %713 = vmatprep.subr.mxu0 %v495
        %714 = vmatpush2.msra.mxu0 %v494
        %715 = vmatprep.subr.mxu0 %v489
        %716 = vmatpush2.msra.mxu0 %v488
        %717 = vmatprep.subr.mxu0 %v483
        %718 = vmatpush2.msra.mxu0 %v482
        %719 = vmatprep.mubr.f32.mxu0 %v189
        %720 = vmatmul.mubr.f32.gmra.mxu0 %v188
        %v721 = vpop.f32.mrf.mxu0
        %v722 = vadd.f32 %v645, %v721
        %v723 = vpop.f32.mrf.mxu0
        %v724 = vadd.f32 %v647, %v723
        %725 = vmatprep.mubr.f32.mxu0 %v193
        %726 = vmatmul.mubr.f32.gmra.mxu0 %v192
        %v727 = vpop.f32.mrf.mxu0
        %v728 = vadd.f32 %v651, %v727
        %v729 = vpop.f32.mrf.mxu0
        %v730 = vadd.f32 %v653, %v729
        %731 = vdwg.mxu0
        %732 = vmatprep.subr.mxu0 %v287
        %733 = vmatpush1.msra.mxu0 %v286
        %734 = vmatprep.subr.mxu0 %v281
        %735 = vmatpush1.msra.mxu0 %v280
        %736 = vmatprep.subr.mxu0 %v275
        %737 = vmatpush1.msra.mxu0 %v274
        %738 = vmatprep.subr.mxu0 %v269
        %739 = vmatpush1.msra.mxu0 %v268
        %740 = vmatprep.subr.mxu0 %v263
        %741 = vmatpush1.msra.mxu0 %v262
        %742 = vmatprep.subr.mxu0 %v257
        %743 = vmatpush1.msra.mxu0 %v256
        %744 = vmatprep.subr.mxu0 %v251
        %745 = vmatpush1.msra.mxu0 %v250
        %746 = vmatprep.subr.mxu0 %v245
        %747 = vmatpush1.msra.mxu0 %v244
        %748 = vmatprep.subr.mxu0 %v239
        %749 = vmatpush1.msra.mxu0 %v238
        %750 = vmatprep.subr.mxu0 %v233
        %751 = vmatpush1.msra.mxu0 %v232
        %752 = vmatprep.subr.mxu0 %v227
        %753 = vmatpush1.msra.mxu0 %v226
        %754 = vmatprep.subr.mxu0 %v221
        %755 = vmatpush1.msra.mxu0 %v220
        %756 = vmatprep.subr.mxu0 %v215
        %757 = vmatpush1.msra.mxu0 %v214
        %758 = vmatprep.subr.mxu0 %v209
        %759 = vmatpush1.msra.mxu0 %v208
        %760 = vmatprep.subr.mxu0 %v203
        %761 = vmatpush1.msra.mxu0 %v202
        %762 = vmatprep.subr.mxu0 %v197
        %763 = vmatpush1.msra.mxu0 %v196
        %764 = vmatprep.subr.mxu0 %v383
        %765 = vmatpush2.msra.mxu0 %v382
        %766 = vmatprep.subr.mxu0 %v377
        %767 = vmatpush2.msra.mxu0 %v376
        %768 = vmatprep.subr.mxu0 %v371
        %769 = vmatpush2.msra.mxu0 %v370
        %770 = vmatprep.subr.mxu0 %v365
        %771 = vmatpush2.msra.mxu0 %v364
        %772 = vmatprep.subr.mxu0 %v359
        %773 = vmatpush2.msra.mxu0 %v358
        %774 = vmatprep.subr.mxu0 %v353
        %775 = vmatpush2.msra.mxu0 %v352
        %776 = vmatprep.subr.mxu0 %v347
        %777 = vmatpush2.msra.mxu0 %v346
        %778 = vmatprep.subr.mxu0 %v341
        %779 = vmatpush2.msra.mxu0 %v340
        %780 = vmatprep.subr.mxu0 %v335
        %781 = vmatpush2.msra.mxu0 %v334
        %782 = vmatprep.subr.mxu0 %v329
        %783 = vmatpush2.msra.mxu0 %v328
        %784 = vmatprep.subr.mxu0 %v323
        %785 = vmatpush2.msra.mxu0 %v322
        %786 = vmatprep.subr.mxu0 %v317
        %787 = vmatpush2.msra.mxu0 %v316
        %788 = vmatprep.subr.mxu0 %v311
        %789 = vmatpush2.msra.mxu0 %v310
        %790 = vmatprep.subr.mxu0 %v305
        %791 = vmatpush2.msra.mxu0 %v304
        %792 = vmatprep.subr.mxu0 %v299
        %793 = vmatpush2.msra.mxu0 %v298
        %794 = vmatprep.subr.mxu0 %v293
        %795 = vmatpush2.msra.mxu0 %v292
        %796 = vmatprep.mubr.f32.mxu0 %v187
        %797 = vmatmul.mubr.f32.gmra.mxu0 %v186
        %v798 = vpop.f32.mrf.mxu0
        %v799 = vadd.f32 0.0, %v798
        %v800 = vpop.f32.mrf.mxu0
        %v801 = vadd.f32 0.0, %v800
        %802 = vmatprep.mubr.f32.mxu0 %v191
        %803 = vmatmul.mubr.f32.gmra.mxu0 %v190
        %v804 = vpop.f32.mrf.mxu0
        %v805 = vadd.f32 0.0, %v804
        %v806 = vpop.f32.mrf.mxu0
        %v807 = vadd.f32 0.0, %v806
        %808 = vdwg.mxu0
        %809 = vmatprep.subr.mxu0 %v479
        %810 = vmatpush1.msra.mxu0 %v478
        %811 = vmatprep.subr.mxu0 %v473
        %812 = vmatpush1.msra.mxu0 %v472
        %813 = vmatprep.subr.mxu0 %v467
        %814 = vmatpush1.msra.mxu0 %v466
        %815 = vmatprep.subr.mxu0 %v461
        %816 = vmatpush1.msra.mxu0 %v460
        %817 = vmatprep.subr.mxu0 %v455
        %818 = vmatpush1.msra.mxu0 %v454
        %819 = vmatprep.subr.mxu0 %v449
        %820 = vmatpush1.msra.mxu0 %v448
        %821 = vmatprep.subr.mxu0 %v443
        %822 = vmatpush1.msra.mxu0 %v442
        %823 = vmatprep.subr.mxu0 %v437
        %824 = vmatpush1.msra.mxu0 %v436
        %825 = vmatprep.subr.mxu0 %v431
        %826 = vmatpush1.msra.mxu0 %v430
        %827 = vmatprep.subr.mxu0 %v425
        %828 = vmatpush1.msra.mxu0 %v424
        %829 = vmatprep.subr.mxu0 %v419
        %830 = vmatpush1.msra.mxu0 %v418
        %831 = vmatprep.subr.mxu0 %v413
        %832 = vmatpush1.msra.mxu0 %v412
        %833 = vmatprep.subr.mxu0 %v407
        %834 = vmatpush1.msra.mxu0 %v406
        %835 = vmatprep.subr.mxu0 %v401
        %836 = vmatpush1.msra.mxu0 %v400
        %837 = vmatprep.subr.mxu0 %v395
        %838 = vmatpush1.msra.mxu0 %v394
        %839 = vmatprep.subr.mxu0 %v389
        %840 = vmatpush1.msra.mxu0 %v388
        %841 = vmatprep.subr.mxu0 %v575
        %842 = vmatpush2.msra.mxu0 %v574
        %843 = vmatprep.subr.mxu0 %v569
        %844 = vmatpush2.msra.mxu0 %v568
        %845 = vmatprep.subr.mxu0 %v563
        %846 = vmatpush2.msra.mxu0 %v562
        %847 = vmatprep.subr.mxu0 %v557
        %848 = vmatpush2.msra.mxu0 %v556
        %849 = vmatprep.subr.mxu0 %v551
        %850 = vmatpush2.msra.mxu0 %v550
        %851 = vmatprep.subr.mxu0 %v545
        %852 = vmatpush2.msra.mxu0 %v544
        %853 = vmatprep.subr.mxu0 %v539
        %854 = vmatpush2.msra.mxu0 %v538
        %855 = vmatprep.subr.mxu0 %v533
        %856 = vmatpush2.msra.mxu0 %v532
        %857 = vmatprep.subr.mxu0 %v527
        %858 = vmatpush2.msra.mxu0 %v526
        %859 = vmatprep.subr.mxu0 %v521
        %860 = vmatpush2.msra.mxu0 %v520
        %861 = vmatprep.subr.mxu0 %v515
        %862 = vmatpush2.msra.mxu0 %v514
        %863 = vmatprep.subr.mxu0 %v509
        %864 = vmatpush2.msra.mxu0 %v508
        %865 = vmatprep.subr.mxu0 %v503
        %866 = vmatpush2.msra.mxu0 %v502
        %867 = vmatprep.subr.mxu0 %v497
        %868 = vmatpush2.msra.mxu0 %v496
        %869 = vmatprep.subr.mxu0 %v491
        %870 = vmatpush2.msra.mxu0 %v490
        %871 = vmatprep.subr.mxu0 %v485
        %872 = vmatpush2.msra.mxu0 %v484
        %873 = vmatprep.mubr.f32.mxu0 %v189
        %874 = vmatmul.mubr.f32.gmra.mxu0 %v188
        %v875 = vpop.f32.mrf.mxu0
        %v876 = vadd.f32 %v799, %v875
        %v877 = vpop.f32.mrf.mxu0
        %v878 = vadd.f32 %v801, %v877
        %879 = vmatprep.mubr.f32.mxu0 %v193
        %880 = vmatmul.mubr.f32.gmra.mxu0 %v192
        %v881 = vpop.f32.mrf.mxu0
        %v882 = vadd.f32 %v805, %v881
        %v883 = vpop.f32.mrf.mxu0
        %v884 = vadd.f32 %v807, %v883
        %885 = vdwg.mxu0
        %886 = vmatprep.subr.mxu0 %v289
        %887 = vmatpush1.msra.mxu0 %v288
        %888 = vmatprep.subr.mxu0 %v283
        %889 = vmatpush1.msra.mxu0 %v282
        %890 = vmatprep.subr.mxu0 %v277
        %891 = vmatpush1.msra.mxu0 %v276
        %892 = vmatprep.subr.mxu0 %v271
        %893 = vmatpush1.msra.mxu0 %v270
        %894 = vmatprep.subr.mxu0 %v265
        %895 = vmatpush1.msra.mxu0 %v264
        %896 = vmatprep.subr.mxu0 %v259
        %897 = vmatpush1.msra.mxu0 %v258
        %898 = vmatprep.subr.mxu0 %v253
        %899 = vmatpush1.msra.mxu0 %v252
        %900 = vmatprep.subr.mxu0 %v247
        %901 = vmatpush1.msra.mxu0 %v246
        %902 = vmatprep.subr.mxu0 %v241
        %903 = vmatpush1.msra.mxu0 %v240
        %904 = vmatprep.subr.mxu0 %v235
        %905 = vmatpush1.msra.mxu0 %v234
        %906 = vmatprep.subr.mxu0 %v229
        %907 = vmatpush1.msra.mxu0 %v228
        %908 = vmatprep.subr.mxu0 %v223
        %909 = vmatpush1.msra.mxu0 %v222
        %910 = vmatprep.subr.mxu0 %v217
        %911 = vmatpush1.msra.mxu0 %v216
        %912 = vmatprep.subr.mxu0 %v211
        %913 = vmatpush1.msra.mxu0 %v210
        %914 = vmatprep.subr.mxu0 %v205
        %915 = vmatpush1.msra.mxu0 %v204
        %916 = vmatprep.subr.mxu0 %v199
        %917 = vmatpush1.msra.mxu0 %v198
        %918 = vmatprep.subr.mxu0 %v385
        %919 = vmatpush2.msra.mxu0 %v384
        %920 = vmatprep.subr.mxu0 %v379
        %921 = vmatpush2.msra.mxu0 %v378
        %922 = vmatprep.subr.mxu0 %v373
        %923 = vmatpush2.msra.mxu0 %v372
        %924 = vmatprep.subr.mxu0 %v367
        %925 = vmatpush2.msra.mxu0 %v366
        %926 = vmatprep.subr.mxu0 %v361
        %927 = vmatpush2.msra.mxu0 %v360
        %928 = vmatprep.subr.mxu0 %v355
        %929 = vmatpush2.msra.mxu0 %v354
        %930 = vmatprep.subr.mxu0 %v349
        %931 = vmatpush2.msra.mxu0 %v348
        %932 = vmatprep.subr.mxu0 %v343
        %933 = vmatpush2.msra.mxu0 %v342
        %934 = vmatprep.subr.mxu0 %v337
        %935 = vmatpush2.msra.mxu0 %v336
        %936 = vmatprep.subr.mxu0 %v331
        %937 = vmatpush2.msra.mxu0 %v330
        %938 = vmatprep.subr.mxu0 %v325
        %939 = vmatpush2.msra.mxu0 %v324
        %940 = vmatprep.subr.mxu0 %v319
        %941 = vmatpush2.msra.mxu0 %v318
        %942 = vmatprep.subr.mxu0 %v313
        %943 = vmatpush2.msra.mxu0 %v312
        %944 = vmatprep.subr.mxu0 %v307
        %945 = vmatpush2.msra.mxu0 %v306
        %946 = vmatprep.subr.mxu0 %v301
        %947 = vmatpush2.msra.mxu0 %v300
        %948 = vmatprep.subr.mxu0 %v295
        %949 = vmatpush2.msra.mxu0 %v294
        %950 = vmatprep.mubr.f32.mxu0 %v187
        %951 = vmatmul.mubr.f32.gmra.mxu0 %v186
        %v952 = vpop.f32.mrf.mxu0
        %v953 = vadd.f32 0.0, %v952
        %v954 = vpop.f32.mrf.mxu0
        %v955 = vadd.f32 0.0, %v954
        %956 = vmatprep.mubr.f32.mxu0 %v191
        %957 = vmatmul.mubr.f32.gmra.mxu0 %v190
        %v958 = vpop.f32.mrf.mxu0
        %v959 = vadd.f32 0.0, %v958
        %v960 = vpop.f32.mrf.mxu0
        %v961 = vadd.f32 0.0, %v960
        %962 = vdwg.mxu0
        %963 = vmatprep.subr.mxu0 %v481
        %964 = vmatpush1.msra.mxu0 %v480
        %965 = vmatprep.subr.mxu0 %v475
        %966 = vmatpush1.msra.mxu0 %v474
        %967 = vmatprep.subr.mxu0 %v469
        %968 = vmatpush1.msra.mxu0 %v468
        %969 = vmatprep.subr.mxu0 %v463
        %970 = vmatpush1.msra.mxu0 %v462
        %971 = vmatprep.subr.mxu0 %v457
        %972 = vmatpush1.msra.mxu0 %v456
        %973 = vmatprep.subr.mxu0 %v451
        %974 = vmatpush1.msra.mxu0 %v450
        %975 = vmatprep.subr.mxu0 %v445
        %976 = vmatpush1.msra.mxu0 %v444
        %977 = vmatprep.subr.mxu0 %v439
        %978 = vmatpush1.msra.mxu0 %v438
        %979 = vmatprep.subr.mxu0 %v433
        %980 = vmatpush1.msra.mxu0 %v432
        %981 = vmatprep.subr.mxu0 %v427
        %982 = vmatpush1.msra.mxu0 %v426
        %983 = vmatprep.subr.mxu0 %v421
        %984 = vmatpush1.msra.mxu0 %v420
        %985 = vmatprep.subr.mxu0 %v415
        %986 = vmatpush1.msra.mxu0 %v414
        %987 = vmatprep.subr.mxu0 %v409
        %988 = vmatpush1.msra.mxu0 %v408
        %989 = vmatprep.subr.mxu0 %v403
        %990 = vmatpush1.msra.mxu0 %v402
        %991 = vmatprep.subr.mxu0 %v397
        %992 = vmatpush1.msra.mxu0 %v396
        %993 = vmatprep.subr.mxu0 %v391
        %994 = vmatpush1.msra.mxu0 %v390
        %995 = vmatprep.subr.mxu0 %v577
        %996 = vmatpush2.msra.mxu0 %v576
        %997 = vmatprep.subr.mxu0 %v571
        %998 = vmatpush2.msra.mxu0 %v570
        %999 = vmatprep.subr.mxu0 %v565
        %1000 = vmatpush2.msra.mxu0 %v564
        %1001 = vmatprep.subr.mxu0 %v559
        %1002 = vmatpush2.msra.mxu0 %v558
        %1003 = vmatprep.subr.mxu0 %v553
        %1004 = vmatpush2.msra.mxu0 %v552
        %1005 = vmatprep.subr.mxu0 %v547
        %1006 = vmatpush2.msra.mxu0 %v546
        %1007 = vmatprep.subr.mxu0 %v541
        %1008 = vmatpush2.msra.mxu0 %v540
        %1009 = vmatprep.subr.mxu0 %v535
        %1010 = vmatpush2.msra.mxu0 %v534
        %1011 = vmatprep.subr.mxu0 %v529
        %1012 = vmatpush2.msra.mxu0 %v528
        %1013 = vmatprep.subr.mxu0 %v523
        %1014 = vmatpush2.msra.mxu0 %v522
        %1015 = vmatprep.subr.mxu0 %v517
        %1016 = vmatpush2.msra.mxu0 %v516
        %1017 = vmatprep.subr.mxu0 %v511
        %1018 = vmatpush2.msra.mxu0 %v510
        %1019 = vmatprep.subr.mxu0 %v505
        %1020 = vmatpush2.msra.mxu0 %v504
        %1021 = vmatprep.subr.mxu0 %v499
        %1022 = vmatpush2.msra.mxu0 %v498
        %1023 = vmatprep.subr.mxu0 %v493
        %1024 = vmatpush2.msra.mxu0 %v492
        %1025 = vmatprep.subr.mxu0 %v487
        %1026 = vmatpush2.msra.mxu0 %v486
        %1027 = vmatprep.mubr.f32.mxu0 %v189
        %1028 = vmatmul.mubr.f32.gmra.mxu0 %v188
        %v1029 = vpop.f32.mrf.mxu0
        %v1030 = vadd.f32 %v953, %v1029
        %v1031 = vpop.f32.mrf.mxu0
        %v1032 = vadd.f32 %v955, %v1031
        %1033 = vmatprep.mubr.f32.mxu0 %v193
        %1034 = vmatmul.mubr.f32.gmra.mxu0 %v192
        %v1035 = vpop.f32.mrf.mxu0
        %v1036 = vadd.f32 %v959, %v1035
        %v1037 = vpop.f32.mrf.mxu0
        %v1038 = vadd.f32 %v961, %v1037
        %1039 = vdwg.mxu0
        %v1040 = vmul.f32 %v722, %v722
        %v1041 = vmul.f32 %v724, %v724
        %v1042 = vmul.f32 %v876, %v876
        %v1043 = vmul.f32 %v728, %v728
        %v1044 = vmul.f32 %v730, %v730
        %v1045 = vmul.f32 %v882, %v882
        %v1046 = vmul.f32 %v878, %v878
        %v1047 = vmul.f32 %v1030, %v1030
        %v1048 = vmul.f32 %v1032, %v1032
        %v1049 = vmul.f32 %v884, %v884
        %v1050 = vmul.f32 %v1036, %v1036
        %v1051 = vmul.f32 %v1038, %v1038
        %v1052 = vadd.f32 %v1040, %v1046
        %v1053 = vadd.f32 %v1041, %v1047
        %v1054 = vadd.f32 %v1042, %v1048
        %v1055 = vadd.f32 %v1043, %v1049
        %v1056 = vadd.f32 %v1044, %v1050
        %v1057 = vadd.f32 %v1045, %v1051
        %v1058 = vld [vmem:[%s2] sm:$0xff]
        %v1059 = vld [vmem:[%s2 + $0x8] sm:$0xff]
        %v1060 = vld [vmem:[%s2 + $0x10] sm:$0xff]
        %v1061 = vld [vmem:[%s2 + $0x18] sm:$0xff]
        %v1062 = vld [vmem:[%s2 + $0x20] sm:$0xff]
        %v1063 = vld [vmem:[%s2 + $0x28] sm:$0xff]
        %v1064 = vld [vmem:[%s2 + $0x30] sm:$0xff]
        %v1065 = vld [vmem:[%s2 + $0x38] sm:$0xff]
        %v1066 = vld [vmem:[%s2 + $0x40] sm:$0xff]
        %v1067 = vld [vmem:[%s2 + $0x48] sm:$0xff]
        %v1068 = vld [vmem:[%s2 + $0x50] sm:$0xff]
        %v1069 = vld [vmem:[%s2 + $0x58] sm:$0xff]
        %v1070 = vld [vmem:[%s2 + $0x60] sm:$0xff]
        %v1071 = vld [vmem:[%s2 + $0x68] sm:$0xff]
        %v1072 = vld [vmem:[%s2 + $0x70] sm:$0xff]
        %v1073 = vld [vmem:[%s2 + $0x78] sm:$0xff]
        %v1074 = vld [vmem:[%s2 + $0x80] sm:$0xff]
        %v1075 = vld [vmem:[%s2 + $0x88] sm:$0xff]
        %v1076 = vld [vmem:[%s2 + $0x90] sm:$0xff]
        %v1077 = vld [vmem:[%s2 + $0x98] sm:$0xff]
        %v1078 = vld [vmem:[%s2 + $0xa0] sm:$0xff]
        %v1079 = vld [vmem:[%s2 + $0xa8] sm:$0xff]
        %v1080 = vld [vmem:[%s2 + $0xb0] sm:$0xff]
        %v1081 = vld [vmem:[%s2 + $0xb8] sm:$0xff]
        %v1082 = vld [vmem:[%s2 + $0xc0] sm:$0xff]
        %v1083 = vld [vmem:[%s2 + $0xc8] sm:$0xff]
        %v1084 = vld [vmem:[%s2 + $0xd0] sm:$0xff]
        %v1085 = vld [vmem:[%s2 + $0xd8] sm:$0xff]
        %v1086 = vld [vmem:[%s2 + $0xe0] sm:$0xff]
        %v1087 = vld [vmem:[%s2 + $0xe8] sm:$0xff]
        %v1088 = vld [vmem:[%s2 + $0xf0] sm:$0xff]
        %v1089 = vld [vmem:[%s2 + $0xf8] sm:$0xff]
        %v1090 = vld [vmem:[%s2 + $0x100] sm:$0xff]
        %v1091 = vld [vmem:[%s2 + $0x108] sm:$0xff]
        %v1092 = vld [vmem:[%s2 + $0x110] sm:$0xff]
        %v1093 = vld [vmem:[%s2 + $0x118] sm:$0xff]
        %v1094 = vld [vmem:[%s2 + $0x120] sm:$0xff]
        %v1095 = vld [vmem:[%s2 + $0x128] sm:$0xff]
        %v1096 = vld [vmem:[%s2 + $0x130] sm:$0xff]
        %v1097 = vld [vmem:[%s2 + $0x138] sm:$0xff]
        %v1098 = vld [vmem:[%s2 + $0x140] sm:$0xff]
        %v1099 = vld [vmem:[%s2 + $0x148] sm:$0xff]
        %v1100 = vld [vmem:[%s2 + $0x150] sm:$0xff]
        %v1101 = vld [vmem:[%s2 + $0x158] sm:$0xff]
        %v1102 = vld [vmem:[%s2 + $0x160] sm:$0xff]
        %v1103 = vld [vmem:[%s2 + $0x168] sm:$0xff]
        %v1104 = vld [vmem:[%s2 + $0x170] sm:$0xff]
        %v1105 = vld [vmem:[%s2 + $0x178] sm:$0xff]
        %1106 = vmatprep.subr.mxu0 0.0
        %1107 = vmatpush1.msra.mxu0 %v1073
        %1108 = vmatprep.subr.mxu0 0.0
        %1109 = vmatpush1.msra.mxu0 %v1072
        %1110 = vmatprep.subr.mxu0 0.0
        %1111 = vmatpush1.msra.mxu0 %v1071
        %1112 = vmatprep.subr.mxu0 0.0
        %1113 = vmatpush1.msra.mxu0 %v1070
        %1114 = vmatprep.subr.mxu0 0.0
        %1115 = vmatpush1.msra.mxu0 %v1069
        %1116 = vmatprep.subr.mxu0 0.0
        %1117 = vmatpush1.msra.mxu0 %v1068
        %1118 = vmatprep.subr.mxu0 0.0
        %1119 = vmatpush1.msra.mxu0 %v1067
        %1120 = vmatprep.subr.mxu0 0.0
        %1121 = vmatpush1.msra.mxu0 %v1066
        %1122 = vmatprep.subr.mxu0 0.0
        %1123 = vmatpush1.msra.mxu0 %v1065
        %1124 = vmatprep.subr.mxu0 0.0
        %1125 = vmatpush1.msra.mxu0 %v1064
        %1126 = vmatprep.subr.mxu0 0.0
        %1127 = vmatpush1.msra.mxu0 %v1063
        %1128 = vmatprep.subr.mxu0 0.0
        %1129 = vmatpush1.msra.mxu0 %v1062
        %1130 = vmatprep.subr.mxu0 0.0
        %1131 = vmatpush1.msra.mxu0 %v1061
        %1132 = vmatprep.subr.mxu0 0.0
        %1133 = vmatpush1.msra.mxu0 %v1060
        %1134 = vmatprep.subr.mxu0 0.0
        %1135 = vmatpush1.msra.mxu0 %v1059
        %1136 = vmatprep.subr.mxu0 0.0
        %1137 = vmatpush1.msra.mxu0 %v1058
        %1138 = vmatprep.subr.mxu0 0.0
        %1139 = vmatpush2.msra.mxu0 %v1089
        %1140 = vmatprep.subr.mxu0 0.0
        %1141 = vmatpush2.msra.mxu0 %v1088
        %1142 = vmatprep.subr.mxu0 0.0
        %1143 = vmatpush2.msra.mxu0 %v1087
        %1144 = vmatprep.subr.mxu0 0.0
        %1145 = vmatpush2.msra.mxu0 %v1086
        %1146 = vmatprep.subr.mxu0 0.0
        %1147 = vmatpush2.msra.mxu0 %v1085
        %1148 = vmatprep.subr.mxu0 0.0
        %1149 = vmatpush2.msra.mxu0 %v1084
        %1150 = vmatprep.subr.mxu0 0.0
        %1151 = vmatpush2.msra.mxu0 %v1083
        %1152 = vmatprep.subr.mxu0 0.0
        %1153 = vmatpush2.msra.mxu0 %v1082
        %1154 = vmatprep.subr.mxu0 0.0
        %1155 = vmatpush2.msra.mxu0 %v1081
        %1156 = vmatprep.subr.mxu0 0.0
        %1157 = vmatpush2.msra.mxu0 %v1080
        %1158 = vmatprep.subr.mxu0 0.0
        %1159 = vmatpush2.msra.mxu0 %v1079
        %1160 = vmatprep.subr.mxu0 0.0
        %1161 = vmatpush2.msra.mxu0 %v1078
        %1162 = vmatprep.subr.mxu0 0.0
        %1163 = vmatpush2.msra.mxu0 %v1077
        %1164 = vmatprep.subr.mxu0 0.0
        %1165 = vmatpush2.msra.mxu0 %v1076
        %1166 = vmatprep.subr.mxu0 0.0
        %1167 = vmatpush2.msra.mxu0 %v1075
        %1168 = vmatprep.subr.mxu0 0.0
        %1169 = vmatpush2.msra.mxu0 %v1074
        %1170 = vmatprep.mubr.f32.mxu0 %v1053
        %1171 = vmatmul.mubr.f32.gmra.mxu0 %v1052
        %v1172 = vpop.f32.mrf.mxu0
        %v1173 = vadd.f32 1e-10, %v1172
        %v1174 = vpop.f32.mrf.mxu0
        %1175 = vmatprep.mubr.f32.mxu0 %v1056
        %1176 = vmatmul.mubr.f32.gmra.mxu0 %v1055
        %v1177 = vpop.f32.mrf.mxu0
        %v1178 = vadd.f32 1e-10, %v1177
        %v1179 = vpop.f32.mrf.mxu0
        %1180 = vdwg.mxu0
        %1181 = vmatprep.subr.mxu0 0.0
        %1182 = vmatpush1.msra.mxu0 %v1105
        %1183 = vmatprep.subr.mxu0 0.0
        %1184 = vmatpush1.msra.mxu0 %v1104
        %1185 = vmatprep.subr.mxu0 0.0
        %1186 = vmatpush1.msra.mxu0 %v1103
        %1187 = vmatprep.subr.mxu0 0.0
        %1188 = vmatpush1.msra.mxu0 %v1102
        %1189 = vmatprep.subr.mxu0 0.0
        %1190 = vmatpush1.msra.mxu0 %v1101
        %1191 = vmatprep.subr.mxu0 0.0
        %1192 = vmatpush1.msra.mxu0 %v1100
        %1193 = vmatprep.subr.mxu0 0.0
        %1194 = vmatpush1.msra.mxu0 %v1099
        %1195 = vmatprep.subr.mxu0 0.0
        %1196 = vmatpush1.msra.mxu0 %v1098
        %1197 = vmatprep.subr.mxu0 0.0
        %1198 = vmatpush1.msra.mxu0 %v1097
        %1199 = vmatprep.subr.mxu0 0.0
        %1200 = vmatpush1.msra.mxu0 %v1096
        %1201 = vmatprep.subr.mxu0 0.0
        %1202 = vmatpush1.msra.mxu0 %v1095
        %1203 = vmatprep.subr.mxu0 0.0
        %1204 = vmatpush1.msra.mxu0 %v1094
        %1205 = vmatprep.subr.mxu0 0.0
        %1206 = vmatpush1.msra.mxu0 %v1093
        %1207 = vmatprep.subr.mxu0 0.0
        %1208 = vmatpush1.msra.mxu0 %v1092
        %1209 = vmatprep.subr.mxu0 0.0
        %1210 = vmatpush1.msra.mxu0 %v1091
        %1211 = vmatprep.subr.mxu0 0.0
        %1212 = vmatpush1.msra.mxu0 %v1090
        %1213 = vmatprep.subr.mxu0 0.0
        %1214 = vmatpush2.msra.mxu0 0.0
        %1215 = vmatprep.subr.mxu0 0.0
        %1216 = vmatpush2.msra.mxu0 0.0
        %1217 = vmatprep.subr.mxu0 0.0
        %1218 = vmatpush2.msra.mxu0 0.0
        %1219 = vmatprep.subr.mxu0 0.0
        %1220 = vmatpush2.msra.mxu0 0.0
        %1221 = vmatprep.subr.mxu0 0.0
        %1222 = vmatpush2.msra.mxu0 0.0
        %1223 = vmatprep.subr.mxu0 0.0
        %1224 = vmatpush2.msra.mxu0 0.0
        %1225 = vmatprep.subr.mxu0 0.0
        %1226 = vmatpush2.msra.mxu0 0.0
        %1227 = vmatprep.subr.mxu0 0.0
        %1228 = vmatpush2.msra.mxu0 0.0
        %1229 = vmatprep.subr.mxu0 0.0
        %1230 = vmatpush2.msra.mxu0 0.0
        %1231 = vmatprep.subr.mxu0 0.0
        %1232 = vmatpush2.msra.mxu0 0.0
        %1233 = vmatprep.subr.mxu0 0.0
        %1234 = vmatpush2.msra.mxu0 0.0
        %1235 = vmatprep.subr.mxu0 0.0
        %1236 = vmatpush2.msra.mxu0 0.0
        %1237 = vmatprep.subr.mxu0 0.0
        %1238 = vmatpush2.msra.mxu0 0.0
        %1239 = vmatprep.subr.mxu0 0.0
        %1240 = vmatpush2.msra.mxu0 0.0
        %1241 = vmatprep.subr.mxu0 0.0
        %1242 = vmatpush2.msra.mxu0 0.0
        %1243 = vmatprep.subr.mxu0 0.0
        %1244 = vmatpush2.msra.mxu0 0.0
        %1245 = vmatprep.mubr.f32.mxu0 0.0
        %1246 = vmatmul.mubr.f32.gmra.mxu0 %v1054
        %v1247 = vpop.f32.mrf.mxu0
        %v1248 = vadd.f32 %v1173, %v1247
        %v1249 = vpop.f32.mrf.mxu0
        %1250 = vmatprep.mubr.f32.mxu0 0.0
        %1251 = vmatmul.mubr.f32.gmra.mxu0 %v1057
        %v1252 = vpop.f32.mrf.mxu0
        %v1253 = vadd.f32 %v1178, %v1252
        %v1254 = vpop.f32.mrf.mxu0
        %1255 = vdwg.mxu0
        %v1256 = vlog2.pop %v1248
        %v1257 = vmul.f32 %v1256, 0.6931472
        %v1258 = vlog2.pop %v1253
        %v1259 = vmul.f32 %v1258, 0.6931472
        %vm1260 = vcmask 326656
        %v1261 = vsel %vm1260, %v1257, 0.0
        %1262 = vadd.xlane.f32.xlu0 %v1261
        %v1263 = vpop.xlane.xlu0 %1262
        %vm1264 = vcmask 321536
        %v1265 = vsel %vm1264, %v1259, 0.0
        %1266 = vadd.xlane.f32.xlu0 %v1265
        %v1267 = vpop.xlane.xlu0 %1266
        %vm1268 = vcmask 1042432
        %v1269 = vsel %vm1268, %v1267, 0.0
        %v1270 = vadd.f32 %v1263, %v1269
        %v1271 = vrot.slane %v1270, 4
        %v1272 = vadd.f32 %v1270, %v1271
        %v1273 = vrot.slane %v1272, 2
        %v1274 = vadd.f32 %v1272, %v1273
        %v1275 = vrot.slane %v1274, 1
        %v1276 = vadd.f32 %v1274, %v1275
        %v1277 = vrcp.pop 440.0
        %v1278 = vmul.f32 %v1276, %v1277
        %v1279 = vsub.f32 %v1257, %v1278
        %v1280 = vsub.f32 %v1259, %v1278
        %v1281 = vmul.f32 %v1279, %v1279
        %v1282 = vmul.f32 %v1280, %v1280
        %v1283 = vsel %vm1260, %v1281, 0.0
        %1284 = vadd.xlane.f32.xlu0 %v1283
        %v1285 = vpop.xlane.xlu0 %1284
        %v1286 = vsel %vm1264, %v1282, 0.0
        %1287 = vadd.xlane.f32.xlu0 %v1286
        %v1288 = vpop.xlane.xlu0 %1287
        %v1289 = vsel %vm1268, %v1288, 0.0
        %v1290 = vadd.f32 %v1285, %v1289
        %v1291 = vrot.slane %v1290, 4
        %v1292 = vadd.f32 %v1290, %v1291
        %v1293 = vrot.slane %v1292, 2
        %v1294 = vadd.f32 %v1292, %v1293
        %v1295 = vrot.slane %v1294, 1
        %v1296 = vadd.f32 %v1294, %v1295
        %v1297 = vmul.f32 %v1296, %v1277
        %v1298 = vadd.f32 %v1297, 1e-05
        %v1299 = vrsqrt.pop %v1298
        %v1300 = vmul.f32 %v1279, %v1299
        %v1301 = vmul.f32 %v1280, %v1299
        %1302 = vst.msk [vmem:[%s185] sm:$0xff] %vm1260, %v1300
        %1303 = vst.msk [vmem:[%s185 + $0x8] sm:$0x7] %vm1264, %v1301
        %p1304 = scmp.lt.s32.totalorder %s15, 1
        %s1305 = scalar_select %p1304, %s15, 1
        %s1306 = smul.addr %s1305, 2
        %s1307 = smul.addr %s1306, 8
        %s1308 = scalar_lea.vmem %s3, %s1307
        // Predicated region
        $region37: #{tpu_custom_call.1} parent=31 // pred_check
          %p1309 = pneg %p101
        $region38: #{tpu_custom_call.1} parent=31 // pred_check_branch
          %1311 = sbr.rel (%p1309) target = $region40
        $region39: #{tpu_custom_call.1} parent=31 // pred_region
          _
        $region40: #{tpu_custom_call.1} parent=31 // pred_fallthru
          _
      $region32: #{tpu_custom_call.1} parent=5 // pred_fallthru
        _
      %p1312 = scmp.le.s32.totalorder 2, %s10
      // Predicated region
      $region41: #{tpu_custom_call.1} parent=5 // pred_check
        %p1313 = pneg %p1312
      $region42: #{tpu_custom_call.1} parent=5 // pred_check_branch
        %1315 = sbr.rel (%p1313) target = $region44
      $region43: #{tpu_custom_call.1} parent=5 // pred_region
        %s1316 = ssub.s32 %s10, 2
        // Predicated region
        $region45: #{tpu_custom_call.1} parent=43 // pred_check
          %p1317 = pneg %p107
        $region46: #{tpu_custom_call.1} parent=43 // pred_check_branch
          %1319 = sbr.rel (%p1317) target = $region48
        $region47: #{tpu_custom_call.1} parent=43 // pred_region
          %p1320 = scmp.lt.s32.totalorder %s16, 1
          %s1321 = scalar_select %p1320, %s16, 1
          %s1322 = smul.addr %s1321, 2
          %s1323 = smul.addr %s1322, 8
          %s1324 = scalar_lea.vmem %s3, %s1323
        $region48: #{tpu_custom_call.1} parent=43 // pred_fallthru
          _
      $region44: #{tpu_custom_call.1} parent=5 // pred_fallthru
        _
    $region6: #{tpu_custom_call.1} parent=1 // loop_footer
      %s14 = sadd.s32 1, %s10
    $region7: #{tpu_custom_call.1} parent=1 // loop_footer_branch
      %9 = sbr.rel target = $region3
    $region8: #{tpu_custom_call.1} parent=1 // loop_exit
      _
    %1325 = vsyncpa [#allocation3], 1
    %s1326 = scalar_lea.sflag [#allocation3], 1
    %1327 = vsyncpa %s1326, 1

</llo_original>
